<compile_context>
chip_gen: v7x
topology: tpu7x:2x2x1
jax: 0.10.0
libtpu: 0.0.40
codegen_flags: <defaults>
</compile_context>

<pallas_src>
import functools

import jax
import jax.numpy as jnp
from jax.experimental import pallas as pl


# 3x3 tap order (kh-major, kw-minor): tap t -> (dh, dw) = (t//3 - 1, t%3 - 1).
# Shared by the host-side weight packing and the in-kernel shifted im2col so
# the matmul contraction lines up.
_TAPS = tuple((dh, dw) for dh in (-1, 0, 1) for dw in (-1, 0, 1))


# ----------------------------- Pallas kernel -------------------------------

def _fused_resnet_kernel(x0_ref, masks_ref, *rest, H, W):
    """Whole ComplexResNet forward, batch folded into lanes.

    x0_ref    : (2, N) f32, N = B*H*W.  Row 0 = real, row 1 = imag, pixels
                flattened image-major (b, h, w).
    masks_ref : (9, N) f32, 0/1 border-valid mask per 3x3 tap (tiled over B).
    rest      : w0, b0, ..., wL, bL, out_ref
                w_l : (2*Cout, 9*2*Cin) bf16, per-tap [[Wr, -Wi], [Wi, Wr]]
                b_l : (2*Cout, 1) f32, [br - bi ; br + bi]
    out_ref   : (2, N) f32.
    """
    out_ref = rest[-1]
    wb = rest[:-1]
    n_conv = len(wb) // 2                 # ConvB layers + OutConv
    n = x0_ref.shape[-1]

    # Hoist the 9 tap-mask rows once (bf16: exact 0/1, pairs with bf16 slabs).
    masks = masks_ref[...].astype(jnp.bfloat16)
    mask_rows = [masks[t:t + 1, :] for t in range(9)]
    tap_offsets = [dh * W + dw for dh, dw in _TAPS]

    x0 = x0_ref[...]                      # (2, N) f32

    def cconv(slab_bf, w_ref, b_ref):
        """Complex conv on a stacked (2*Cin, N) bf16 slab -> (2*Cout, N) f32."""
        pieces = []
        for t, off in enumerate(tap_offsets):
            # shifted[:, p] = slab[:, p + off]; border masks zero invalid taps
            # (and make the wrap across image boundaries harmless).
            shifted = slab_bf if off == 0 else jnp.roll(slab_bf, -off, axis=1)
            pieces.append(shifted * mask_rows[t])
        xbig = jnp.concatenate(pieces, axis=0)          # (9*2*Cin, N) bf16
        y = jnp.dot(w_ref[...], xbig, preferred_element_type=jnp.float32)
        return y + b_ref[...]                           # (2*Cout, N) f32

    # ConvB: num_layer x (complex conv + ComplexReLU).  bn_flag=False -> no BN.
    slab_bf = x0.astype(jnp.bfloat16)
    y = None
    for layer in range(n_conv - 1):
        y = jnp.maximum(cconv(slab_bf, wb[2 * layer], wb[2 * layer + 1]), 0.0)
        slab_bf = y.astype(jnp.bfloat16)

    # x1 = ConvB(x0) + x0  (1-channel x0 broadcast over the FM channels).
    fm = y.shape[0] // 2
    res = jnp.concatenate([jnp.broadcast_to(x0[0:1, :], (fm, n)),
                           jnp.broadcast_to(x0[1:2, :], (fm, n))], axis=0)
    slab_bf = (y + res).astype(jnp.bfloat16)

    # OutConv: FM -> 1, no BN, no activation.  Its (2, N) result is already
    # the stacked [real; imag] layout -> single full-width lane-dense store.
    out_ref[...] = cconv(slab_bf, wb[-2], wb[-1])


# ------------------------------- host glue ----------------------------------

def _make_tap_masks(H, W, B):
    """(9, B*H*W) 0/1 masks: tap (dh,dw) valid iff (h+dh, w+dw) is in-image."""
    hh, ww = jnp.meshgrid(jnp.arange(H), jnp.arange(W), indexing="ij")
    rows = []
    for dh, dw in _TAPS:
        valid = (hh + dh >= 0) & (hh + dh < H) & (ww + dw >= 0) & (ww + dw < W)
        rows.append(valid.reshape(-1))
    m = jnp.stack(rows, axis=0).astype(jnp.float32)     # (9, H*W)
    return jnp.tile(m, (1, B))                          # (9, B*H*W)


def init_params(key, fm=4, k=3, num_layer=4):
    """Deterministic packed params for ConvB (num_layer convs) + OutConv.

    Per layer:
      w_big (2*Cout, 9*2*Cin) bf16, columns tap-major with per-tap
            [real-ci block, imag-ci block] = [[Wr, -Wi], [Wi, Wr]],
      b_big (2*Cout, 1) f32 = [br - bi ; br + bi].
    """
    chans = [(1, fm)] + [(fm, fm)] * (num_layer - 1) + [(fm, 1)]
    params = []
    for cin, cout in chans:
        key, k1, k2, k3, k4 = jax.random.split(key, 5)
        scale = 1.0 / float(cin * k * k) ** 0.5
        wr = jax.random.normal(k1, (cout, cin, k, k), jnp.float32) * scale
        wi = jax.random.normal(k2, (cout, cin, k, k), jnp.float32) * scale
        br = jax.random.normal(k3, (cout,), jnp.float32) * scale
        bi = jax.random.normal(k4, (cout,), jnp.float32) * scale
        # (Cout, Cin, kh, kw) -> (Cout, tap, Cin), taps kh-major (matches _TAPS).
        wr_t = jnp.transpose(wr.reshape(cout, cin, k * k), (0, 2, 1))
        wi_t = jnp.transpose(wi.reshape(cout, cin, k * k), (0, 2, 1))
        top = jnp.concatenate([wr_t, -wi_t], axis=2).reshape(cout, k * k * 2 * cin)
        bot = jnp.concatenate([wi_t, wr_t], axis=2).reshape(cout, k * k * 2 * cin)
        w_big = jnp.concatenate([top, bot], axis=0).astype(jnp.bfloat16)
        b_big = jnp.concatenate([br - bi, br + bi]).reshape(2 * cout, 1)
        params.append((w_big, b_big.astype(jnp.float32)))
    return params


def complex_resnet_forward(x, params, masks, H, W):
    """x: (2, B*H, W) float32; x[0]=real, x[1]=imag.  Returns (2, B, H*W) f32."""
    HW = H * W
    B = x.shape[1] // H
    N = B * HW
    x0 = x.astype(jnp.float32).reshape(2, N)            # (2, B*H*W)

    wb_args, wb_specs = [], []
    for (w_big, b_big) in params:
        wb_args += [w_big, b_big]
        wb_specs += [pl.BlockSpec(w_big.shape, lambda i: (0, 0)),
                     pl.BlockSpec(b_big.shape, lambda i: (0, 0))]

    out = pl.pallas_call(
        functools.partial(_fused_resnet_kernel, H=H, W=W),
        out_shape=jax.ShapeDtypeStruct((2, N), jnp.float32),
        grid=(1,),                                      # whole net, one step
        in_specs=[pl.BlockSpec((2, N), lambda i: (0, 0)),   # [real; imag] slab
                  pl.BlockSpec((9, N), lambda i: (0, 0))]   # tap masks
                 + wb_specs,
        out_specs=pl.BlockSpec((2, N), lambda i: (0, 0)),
    )(x0, masks, *wb_args)

    # TODO(synk): torch casts the output to .double(); TPU has no native f64,
    # so the result stays float32.
    return out.reshape(2, B, HW)


# --------------------------------- main --------------------------------------

if __name__ == "__main__":
    H, W = 16, 16
    B = 2                              # x.view(-1, 1, H, W) -> batch of 2
    key = jax.random.PRNGKey(0)
    kx, kp = jax.random.split(key)

    x = jax.random.normal(kx, (2, B * H, W), jnp.float32)   # [real; imag] stacked
    params = init_params(kp, fm=4, k=3, num_layer=4)
    masks = _make_tap_masks(H, W, B)

    fwd = jax.jit(functools.partial(complex_resnet_forward, H=H, W=W))
    out = fwd(x, params, masks)
    jax.block_until_ready(out)

    assert out.shape == (2, B, H * W), out.shape
    assert out.dtype == jnp.float32
    print("KERNEL_OK")
</pallas_src>

<mosaic_0001>
module attributes {stable_mosaic.version = 11 : i64} {
  func.func @_fused_resnet_kernel(%arg0: i32, %arg1: memref<2x512xf32, #tpu.memory_space<vmem>>, %arg2: memref<9x512xf32, #tpu.memory_space<vmem>>, %arg3: memref<8x18xbf16, #tpu.memory_space<vmem>>, %arg4: memref<8x1xf32, #tpu.memory_space<vmem>>, %arg5: memref<8x72xbf16, #tpu.memory_space<vmem>>, %arg6: memref<8x1xf32, #tpu.memory_space<vmem>>, %arg7: memref<8x72xbf16, #tpu.memory_space<vmem>>, %arg8: memref<8x1xf32, #tpu.memory_space<vmem>>, %arg9: memref<8x72xbf16, #tpu.memory_space<vmem>>, %arg10: memref<8x1xf32, #tpu.memory_space<vmem>>, %arg11: memref<2x72xbf16, #tpu.memory_space<vmem>>, %arg12: memref<2x1xf32, #tpu.memory_space<vmem>>, %arg13: memref<2x512xf32, #tpu.memory_space<vmem>>) attributes {dimension_semantics = [#tpu.dimension_semantics<arbitrary>], iteration_bounds = array<i64: 1>, scalar_prefetch = 0 : i64, scratch_operands = 0 : i64, tpu.core_type = #tpu.core_type<tc>, window_params = [{pipeline_mode = #tpu.pipeline_mode<synchronous>, transform_indices = @transform_0, window_bounds = array<i64: 2, 512>}, {pipeline_mode = #tpu.pipeline_mode<synchronous>, transform_indices = @transform_1, window_bounds = array<i64: 9, 512>}, {pipeline_mode = #tpu.pipeline_mode<synchronous>, transform_indices = @transform_2, window_bounds = array<i64: 8, 18>}, {pipeline_mode = #tpu.pipeline_mode<synchronous>, transform_indices = @transform_3, window_bounds = array<i64: 8, 1>}, {pipeline_mode = #tpu.pipeline_mode<synchronous>, transform_indices = @transform_4, window_bounds = array<i64: 8, 72>}, {pipeline_mode = #tpu.pipeline_mode<synchronous>, transform_indices = @transform_5, window_bounds = array<i64: 8, 1>}, {pipeline_mode = #tpu.pipeline_mode<synchronous>, transform_indices = @transform_6, window_bounds = array<i64: 8, 72>}, {pipeline_mode = #tpu.pipeline_mode<synchronous>, transform_indices = @transform_7, window_bounds = array<i64: 8, 1>}, {pipeline_mode = #tpu.pipeline_mode<synchronous>, transform_indices = @transform_8, window_bounds = array<i64: 8, 72>}, {pipeline_mode = #tpu.pipeline_mode<synchronous>, transform_indices = @transform_9, window_bounds = array<i64: 8, 1>}, {pipeline_mode = #tpu.pipeline_mode<synchronous>, transform_indices = @transform_10, window_bounds = array<i64: 2, 72>}, {pipeline_mode = #tpu.pipeline_mode<synchronous>, transform_indices = @transform_11, window_bounds = array<i64: 2, 1>}, {pipeline_mode = #tpu.pipeline_mode<synchronous>, transform_indices = @transform_12, window_bounds = array<i64: 2, 512>}]} {
    %c0 = arith.constant 0 : index
    %c0_0 = arith.constant 0 : index
    %0 = vector.load %arg2[%c0, %c0_0] : memref<9x512xf32, #tpu.memory_space<vmem>>, vector<9x512xf32>
    %1 = arith.truncf %0 : vector<9x512xf32> to vector<9x512xbf16>
    %2 = vector.extract_strided_slice %1 {offsets = [0, 0], sizes = [1, 512], strides = [1, 1]} : vector<9x512xbf16> to vector<1x512xbf16>
    %3 = vector.extract_strided_slice %1 {offsets = [1, 0], sizes = [1, 512], strides = [1, 1]} : vector<9x512xbf16> to vector<1x512xbf16>
    %4 = vector.extract_strided_slice %1 {offsets = [2, 0], sizes = [1, 512], strides = [1, 1]} : vector<9x512xbf16> to vector<1x512xbf16>
    %5 = vector.extract_strided_slice %1 {offsets = [3, 0], sizes = [1, 512], strides = [1, 1]} : vector<9x512xbf16> to vector<1x512xbf16>
    %6 = vector.extract_strided_slice %1 {offsets = [4, 0], sizes = [1, 512], strides = [1, 1]} : vector<9x512xbf16> to vector<1x512xbf16>
    %7 = vector.extract_strided_slice %1 {offsets = [5, 0], sizes = [1, 512], strides = [1, 1]} : vector<9x512xbf16> to vector<1x512xbf16>
    %8 = vector.extract_strided_slice %1 {offsets = [6, 0], sizes = [1, 512], strides = [1, 1]} : vector<9x512xbf16> to vector<1x512xbf16>
    %9 = vector.extract_strided_slice %1 {offsets = [7, 0], sizes = [1, 512], strides = [1, 1]} : vector<9x512xbf16> to vector<1x512xbf16>
    %10 = vector.extract_strided_slice %1 {offsets = [8, 0], sizes = [1, 512], strides = [1, 1]} : vector<9x512xbf16> to vector<1x512xbf16>
    %c0_1 = arith.constant 0 : index
    %c0_2 = arith.constant 0 : index
    %11 = vector.load %arg1[%c0_1, %c0_2] : memref<2x512xf32, #tpu.memory_space<vmem>>, vector<2x512xf32>
    %12 = arith.truncf %11 : vector<2x512xf32> to vector<2x512xbf16>
    %13 = vector.extract_strided_slice %12 {offsets = [0, 495], sizes = [2, 17], strides = [1, 1]} : vector<2x512xbf16> to vector<2x17xbf16>
    %14 = vector.extract_strided_slice %12 {offsets = [0, 0], sizes = [2, 495], strides = [1, 1]} : vector<2x512xbf16> to vector<2x495xbf16>
    %15 = tpu.concatenate %13, %14 in 1 : vector<2x17xbf16>, vector<2x495xbf16> -> vector<2x512xbf16>
    %16 = vector.broadcast %2 : vector<1x512xbf16> to vector<2x512xbf16>
    %17 = arith.mulf %15, %16 : vector<2x512xbf16>
    %18 = vector.extract_strided_slice %12 {offsets = [0, 496], sizes = [2, 16], strides = [1, 1]} : vector<2x512xbf16> to vector<2x16xbf16>
    %19 = vector.extract_strided_slice %12 {offsets = [0, 0], sizes = [2, 496], strides = [1, 1]} : vector<2x512xbf16> to vector<2x496xbf16>
    %20 = tpu.concatenate %18, %19 in 1 : vector<2x16xbf16>, vector<2x496xbf16> -> vector<2x512xbf16>
    %21 = vector.broadcast %3 : vector<1x512xbf16> to vector<2x512xbf16>
    %22 = arith.mulf %20, %21 : vector<2x512xbf16>
    %23 = vector.extract_strided_slice %12 {offsets = [0, 497], sizes = [2, 15], strides = [1, 1]} : vector<2x512xbf16> to vector<2x15xbf16>
    %24 = vector.extract_strided_slice %12 {offsets = [0, 0], sizes = [2, 497], strides = [1, 1]} : vector<2x512xbf16> to vector<2x497xbf16>
    %25 = tpu.concatenate %23, %24 in 1 : vector<2x15xbf16>, vector<2x497xbf16> -> vector<2x512xbf16>
    %26 = vector.broadcast %4 : vector<1x512xbf16> to vector<2x512xbf16>
    %27 = arith.mulf %25, %26 : vector<2x512xbf16>
    %28 = vector.extract_strided_slice %12 {offsets = [0, 511], sizes = [2, 1], strides = [1, 1]} : vector<2x512xbf16> to vector<2x1xbf16>
    %29 = vector.extract_strided_slice %12 {offsets = [0, 0], sizes = [2, 511], strides = [1, 1]} : vector<2x512xbf16> to vector<2x511xbf16>
    %30 = tpu.concatenate %28, %29 in 1 : vector<2x1xbf16>, vector<2x511xbf16> -> vector<2x512xbf16>
    %31 = vector.broadcast %5 : vector<1x512xbf16> to vector<2x512xbf16>
    %32 = arith.mulf %30, %31 : vector<2x512xbf16>
    %33 = vector.broadcast %6 : vector<1x512xbf16> to vector<2x512xbf16>
    %34 = arith.mulf %12, %33 : vector<2x512xbf16>
    %35 = vector.extract_strided_slice %12 {offsets = [0, 1], sizes = [2, 511], strides = [1, 1]} : vector<2x512xbf16> to vector<2x511xbf16>
    %36 = vector.extract_strided_slice %12 {offsets = [0, 0], sizes = [2, 1], strides = [1, 1]} : vector<2x512xbf16> to vector<2x1xbf16>
    %37 = tpu.concatenate %35, %36 in 1 : vector<2x511xbf16>, vector<2x1xbf16> -> vector<2x512xbf16>
    %38 = vector.broadcast %7 : vector<1x512xbf16> to vector<2x512xbf16>
    %39 = arith.mulf %37, %38 : vector<2x512xbf16>
    %40 = vector.extract_strided_slice %12 {offsets = [0, 15], sizes = [2, 497], strides = [1, 1]} : vector<2x512xbf16> to vector<2x497xbf16>
    %41 = vector.extract_strided_slice %12 {offsets = [0, 0], sizes = [2, 15], strides = [1, 1]} : vector<2x512xbf16> to vector<2x15xbf16>
    %42 = tpu.concatenate %40, %41 in 1 : vector<2x497xbf16>, vector<2x15xbf16> -> vector<2x512xbf16>
    %43 = vector.broadcast %8 : vector<1x512xbf16> to vector<2x512xbf16>
    %44 = arith.mulf %42, %43 : vector<2x512xbf16>
    %45 = vector.extract_strided_slice %12 {offsets = [0, 16], sizes = [2, 496], strides = [1, 1]} : vector<2x512xbf16> to vector<2x496xbf16>
    %46 = vector.extract_strided_slice %12 {offsets = [0, 0], sizes = [2, 16], strides = [1, 1]} : vector<2x512xbf16> to vector<2x16xbf16>
    %47 = tpu.concatenate %45, %46 in 1 : vector<2x496xbf16>, vector<2x16xbf16> -> vector<2x512xbf16>
    %48 = vector.broadcast %9 : vector<1x512xbf16> to vector<2x512xbf16>
    %49 = arith.mulf %47, %48 : vector<2x512xbf16>
    %50 = vector.extract_strided_slice %12 {offsets = [0, 17], sizes = [2, 495], strides = [1, 1]} : vector<2x512xbf16> to vector<2x495xbf16>
    %51 = vector.extract_strided_slice %12 {offsets = [0, 0], sizes = [2, 17], strides = [1, 1]} : vector<2x512xbf16> to vector<2x17xbf16>
    %52 = tpu.concatenate %50, %51 in 1 : vector<2x495xbf16>, vector<2x17xbf16> -> vector<2x512xbf16>
    %53 = vector.broadcast %10 : vector<1x512xbf16> to vector<2x512xbf16>
    %54 = arith.mulf %52, %53 : vector<2x512xbf16>
    %55 = tpu.concatenate %17, %22, %27, %32, %34, %39, %44, %49, %54 in 0 : vector<2x512xbf16>, vector<2x512xbf16>, vector<2x512xbf16>, vector<2x512xbf16>, vector<2x512xbf16>, vector<2x512xbf16>, vector<2x512xbf16>, vector<2x512xbf16>, vector<2x512xbf16> -> vector<18x512xbf16>
    %c0_3 = arith.constant 0 : index
    %c0_4 = arith.constant 0 : index
    %56 = vector.load %arg3[%c0_3, %c0_4] : memref<8x18xbf16, #tpu.memory_space<vmem>>, vector<8x18xbf16>
    %cst = arith.constant dense<0.000000e+00> : vector<8x512xf32>
    %57 = tpu.matmul %56, %55, %cst {dimension_numbers = #tpu.dot_dimension_numbers<[1], [0], [0], [1], [0, 0, 1, 1], [], []>} : vector<8x18xbf16>, vector<18x512xbf16>, vector<8x512xf32> -> vector<8x512xf32>
    %c0_5 = arith.constant 0 : index
    %c0_6 = arith.constant 0 : index
    %58 = vector.load %arg4[%c0_5, %c0_6] : memref<8x1xf32, #tpu.memory_space<vmem>>, vector<8x1xf32>
    %59 = vector.broadcast %58 : vector<8x1xf32> to vector<8x512xf32>
    %60 = arith.addf %57, %59 : vector<8x512xf32>
    %cst_7 = arith.constant 0.000000e+00 : f32
    %61 = vector.broadcast %cst_7 : f32 to vector<8x512xf32>
    %62 = arith.maximumf %60, %61 : vector<8x512xf32>
    %63 = arith.truncf %62 : vector<8x512xf32> to vector<8x512xbf16>
    %64 = vector.extract_strided_slice %63 {offsets = [0, 495], sizes = [8, 17], strides = [1, 1]} : vector<8x512xbf16> to vector<8x17xbf16>
    %65 = vector.extract_strided_slice %63 {offsets = [0, 0], sizes = [8, 495], strides = [1, 1]} : vector<8x512xbf16> to vector<8x495xbf16>
    %66 = tpu.concatenate %64, %65 in 1 : vector<8x17xbf16>, vector<8x495xbf16> -> vector<8x512xbf16>
    %67 = vector.broadcast %2 : vector<1x512xbf16> to vector<8x512xbf16>
    %68 = arith.mulf %66, %67 : vector<8x512xbf16>
    %69 = vector.extract_strided_slice %63 {offsets = [0, 496], sizes = [8, 16], strides = [1, 1]} : vector<8x512xbf16> to vector<8x16xbf16>
    %70 = vector.extract_strided_slice %63 {offsets = [0, 0], sizes = [8, 496], strides = [1, 1]} : vector<8x512xbf16> to vector<8x496xbf16>
    %71 = tpu.concatenate %69, %70 in 1 : vector<8x16xbf16>, vector<8x496xbf16> -> vector<8x512xbf16>
    %72 = vector.broadcast %3 : vector<1x512xbf16> to vector<8x512xbf16>
    %73 = arith.mulf %71, %72 : vector<8x512xbf16>
    %74 = vector.extract_strided_slice %63 {offsets = [0, 497], sizes = [8, 15], strides = [1, 1]} : vector<8x512xbf16> to vector<8x15xbf16>
    %75 = vector.extract_strided_slice %63 {offsets = [0, 0], sizes = [8, 497], strides = [1, 1]} : vector<8x512xbf16> to vector<8x497xbf16>
    %76 = tpu.concatenate %74, %75 in 1 : vector<8x15xbf16>, vector<8x497xbf16> -> vector<8x512xbf16>
    %77 = vector.broadcast %4 : vector<1x512xbf16> to vector<8x512xbf16>
    %78 = arith.mulf %76, %77 : vector<8x512xbf16>
    %79 = vector.extract_strided_slice %63 {offsets = [0, 511], sizes = [8, 1], strides = [1, 1]} : vector<8x512xbf16> to vector<8x1xbf16>
    %80 = vector.extract_strided_slice %63 {offsets = [0, 0], sizes = [8, 511], strides = [1, 1]} : vector<8x512xbf16> to vector<8x511xbf16>
    %81 = tpu.concatenate %79, %80 in 1 : vector<8x1xbf16>, vector<8x511xbf16> -> vector<8x512xbf16>
    %82 = vector.broadcast %5 : vector<1x512xbf16> to vector<8x512xbf16>
    %83 = arith.mulf %81, %82 : vector<8x512xbf16>
    %84 = vector.broadcast %6 : vector<1x512xbf16> to vector<8x512xbf16>
    %85 = arith.mulf %63, %84 : vector<8x512xbf16>
    %86 = vector.extract_strided_slice %63 {offsets = [0, 1], sizes = [8, 511], strides = [1, 1]} : vector<8x512xbf16> to vector<8x511xbf16>
    %87 = vector.extract_strided_slice %63 {offsets = [0, 0], sizes = [8, 1], strides = [1, 1]} : vector<8x512xbf16> to vector<8x1xbf16>
    %88 = tpu.concatenate %86, %87 in 1 : vector<8x511xbf16>, vector<8x1xbf16> -> vector<8x512xbf16>
    %89 = vector.broadcast %7 : vector<1x512xbf16> to vector<8x512xbf16>
    %90 = arith.mulf %88, %89 : vector<8x512xbf16>
    %91 = vector.extract_strided_slice %63 {offsets = [0, 15], sizes = [8, 497], strides = [1, 1]} : vector<8x512xbf16> to vector<8x497xbf16>
    %92 = vector.extract_strided_slice %63 {offsets = [0, 0], sizes = [8, 15], strides = [1, 1]} : vector<8x512xbf16> to vector<8x15xbf16>
    %93 = tpu.concatenate %91, %92 in 1 : vector<8x497xbf16>, vector<8x15xbf16> -> vector<8x512xbf16>
    %94 = vector.broadcast %8 : vector<1x512xbf16> to vector<8x512xbf16>
    %95 = arith.mulf %93, %94 : vector<8x512xbf16>
    %96 = vector.extract_strided_slice %63 {offsets = [0, 16], sizes = [8, 496], strides = [1, 1]} : vector<8x512xbf16> to vector<8x496xbf16>
    %97 = vector.extract_strided_slice %63 {offsets = [0, 0], sizes = [8, 16], strides = [1, 1]} : vector<8x512xbf16> to vector<8x16xbf16>
    %98 = tpu.concatenate %96, %97 in 1 : vector<8x496xbf16>, vector<8x16xbf16> -> vector<8x512xbf16>
    %99 = vector.broadcast %9 : vector<1x512xbf16> to vector<8x512xbf16>
    %100 = arith.mulf %98, %99 : vector<8x512xbf16>
    %101 = vector.extract_strided_slice %63 {offsets = [0, 17], sizes = [8, 495], strides = [1, 1]} : vector<8x512xbf16> to vector<8x495xbf16>
    %102 = vector.extract_strided_slice %63 {offsets = [0, 0], sizes = [8, 17], strides = [1, 1]} : vector<8x512xbf16> to vector<8x17xbf16>
    %103 = tpu.concatenate %101, %102 in 1 : vector<8x495xbf16>, vector<8x17xbf16> -> vector<8x512xbf16>
    %104 = vector.broadcast %10 : vector<1x512xbf16> to vector<8x512xbf16>
    %105 = arith.mulf %103, %104 : vector<8x512xbf16>
    %106 = tpu.concatenate %68, %73, %78, %83, %85, %90, %95, %100, %105 in 0 : vector<8x512xbf16>, vector<8x512xbf16>, vector<8x512xbf16>, vector<8x512xbf16>, vector<8x512xbf16>, vector<8x512xbf16>, vector<8x512xbf16>, vector<8x512xbf16>, vector<8x512xbf16> -> vector<72x512xbf16>
    %c0_8 = arith.constant 0 : index
    %c0_9 = arith.constant 0 : index
    %107 = vector.load %arg5[%c0_8, %c0_9] : memref<8x72xbf16, #tpu.memory_space<vmem>>, vector<8x72xbf16>
    %cst_10 = arith.constant dense<0.000000e+00> : vector<8x512xf32>
    %108 = tpu.matmul %107, %106, %cst_10 {dimension_numbers = #tpu.dot_dimension_numbers<[1], [0], [0], [1], [0, 0, 1, 1], [], []>} : vector<8x72xbf16>, vector<72x512xbf16>, vector<8x512xf32> -> vector<8x512xf32>
    %c0_11 = arith.constant 0 : index
    %c0_12 = arith.constant 0 : index
    %109 = vector.load %arg6[%c0_11, %c0_12] : memref<8x1xf32, #tpu.memory_space<vmem>>, vector<8x1xf32>
    %110 = vector.broadcast %109 : vector<8x1xf32> to vector<8x512xf32>
    %111 = arith.addf %108, %110 : vector<8x512xf32>
    %cst_13 = arith.constant 0.000000e+00 : f32
    %112 = vector.broadcast %cst_13 : f32 to vector<8x512xf32>
    %113 = arith.maximumf %111, %112 : vector<8x512xf32>
    %114 = arith.truncf %113 : vector<8x512xf32> to vector<8x512xbf16>
    %115 = vector.extract_strided_slice %114 {offsets = [0, 495], sizes = [8, 17], strides = [1, 1]} : vector<8x512xbf16> to vector<8x17xbf16>
    %116 = vector.extract_strided_slice %114 {offsets = [0, 0], sizes = [8, 495], strides = [1, 1]} : vector<8x512xbf16> to vector<8x495xbf16>
    %117 = tpu.concatenate %115, %116 in 1 : vector<8x17xbf16>, vector<8x495xbf16> -> vector<8x512xbf16>
    %118 = vector.broadcast %2 : vector<1x512xbf16> to vector<8x512xbf16>
    %119 = arith.mulf %117, %118 : vector<8x512xbf16>
    %120 = vector.extract_strided_slice %114 {offsets = [0, 496], sizes = [8, 16], strides = [1, 1]} : vector<8x512xbf16> to vector<8x16xbf16>
    %121 = vector.extract_strided_slice %114 {offsets = [0, 0], sizes = [8, 496], strides = [1, 1]} : vector<8x512xbf16> to vector<8x496xbf16>
    %122 = tpu.concatenate %120, %121 in 1 : vector<8x16xbf16>, vector<8x496xbf16> -> vector<8x512xbf16>
    %123 = vector.broadcast %3 : vector<1x512xbf16> to vector<8x512xbf16>
    %124 = arith.mulf %122, %123 : vector<8x512xbf16>
    %125 = vector.extract_strided_slice %114 {offsets = [0, 497], sizes = [8, 15], strides = [1, 1]} : vector<8x512xbf16> to vector<8x15xbf16>
    %126 = vector.extract_strided_slice %114 {offsets = [0, 0], sizes = [8, 497], strides = [1, 1]} : vector<8x512xbf16> to vector<8x497xbf16>
    %127 = tpu.concatenate %125, %126 in 1 : vector<8x15xbf16>, vector<8x497xbf16> -> vector<8x512xbf16>
    %128 = vector.broadcast %4 : vector<1x512xbf16> to vector<8x512xbf16>
    %129 = arith.mulf %127, %128 : vector<8x512xbf16>
    %130 = vector.extract_strided_slice %114 {offsets = [0, 511], sizes = [8, 1], strides = [1, 1]} : vector<8x512xbf16> to vector<8x1xbf16>
    %131 = vector.extract_strided_slice %114 {offsets = [0, 0], sizes = [8, 511], strides = [1, 1]} : vector<8x512xbf16> to vector<8x511xbf16>
    %132 = tpu.concatenate %130, %131 in 1 : vector<8x1xbf16>, vector<8x511xbf16> -> vector<8x512xbf16>
    %133 = vector.broadcast %5 : vector<1x512xbf16> to vector<8x512xbf16>
    %134 = arith.mulf %132, %133 : vector<8x512xbf16>
    %135 = vector.broadcast %6 : vector<1x512xbf16> to vector<8x512xbf16>
    %136 = arith.mulf %114, %135 : vector<8x512xbf16>
    %137 = vector.extract_strided_slice %114 {offsets = [0, 1], sizes = [8, 511], strides = [1, 1]} : vector<8x512xbf16> to vector<8x511xbf16>
    %138 = vector.extract_strided_slice %114 {offsets = [0, 0], sizes = [8, 1], strides = [1, 1]} : vector<8x512xbf16> to vector<8x1xbf16>
    %139 = tpu.concatenate %137, %138 in 1 : vector<8x511xbf16>, vector<8x1xbf16> -> vector<8x512xbf16>
    %140 = vector.broadcast %7 : vector<1x512xbf16> to vector<8x512xbf16>
    %141 = arith.mulf %139, %140 : vector<8x512xbf16>
    %142 = vector.extract_strided_slice %114 {offsets = [0, 15], sizes = [8, 497], strides = [1, 1]} : vector<8x512xbf16> to vector<8x497xbf16>
    %143 = vector.extract_strided_slice %114 {offsets = [0, 0], sizes = [8, 15], strides = [1, 1]} : vector<8x512xbf16> to vector<8x15xbf16>
    %144 = tpu.concatenate %142, %143 in 1 : vector<8x497xbf16>, vector<8x15xbf16> -> vector<8x512xbf16>
    %145 = vector.broadcast %8 : vector<1x512xbf16> to vector<8x512xbf16>
    %146 = arith.mulf %144, %145 : vector<8x512xbf16>
    %147 = vector.extract_strided_slice %114 {offsets = [0, 16], sizes = [8, 496], strides = [1, 1]} : vector<8x512xbf16> to vector<8x496xbf16>
    %148 = vector.extract_strided_slice %114 {offsets = [0, 0], sizes = [8, 16], strides = [1, 1]} : vector<8x512xbf16> to vector<8x16xbf16>
    %149 = tpu.concatenate %147, %148 in 1 : vector<8x496xbf16>, vector<8x16xbf16> -> vector<8x512xbf16>
    %150 = vector.broadcast %9 : vector<1x512xbf16> to vector<8x512xbf16>
    %151 = arith.mulf %149, %150 : vector<8x512xbf16>
    %152 = vector.extract_strided_slice %114 {offsets = [0, 17], sizes = [8, 495], strides = [1, 1]} : vector<8x512xbf16> to vector<8x495xbf16>
    %153 = vector.extract_strided_slice %114 {offsets = [0, 0], sizes = [8, 17], strides = [1, 1]} : vector<8x512xbf16> to vector<8x17xbf16>
    %154 = tpu.concatenate %152, %153 in 1 : vector<8x495xbf16>, vector<8x17xbf16> -> vector<8x512xbf16>
    %155 = vector.broadcast %10 : vector<1x512xbf16> to vector<8x512xbf16>
    %156 = arith.mulf %154, %155 : vector<8x512xbf16>
    %157 = tpu.concatenate %119, %124, %129, %134, %136, %141, %146, %151, %156 in 0 : vector<8x512xbf16>, vector<8x512xbf16>, vector<8x512xbf16>, vector<8x512xbf16>, vector<8x512xbf16>, vector<8x512xbf16>, vector<8x512xbf16>, vector<8x512xbf16>, vector<8x512xbf16> -> vector<72x512xbf16>
    %c0_14 = arith.constant 0 : index
    %c0_15 = arith.constant 0 : index
    %158 = vector.load %arg7[%c0_14, %c0_15] : memref<8x72xbf16, #tpu.memory_space<vmem>>, vector<8x72xbf16>
    %cst_16 = arith.constant dense<0.000000e+00> : vector<8x512xf32>
    %159 = tpu.matmul %158, %157, %cst_16 {dimension_numbers = #tpu.dot_dimension_numbers<[1], [0], [0], [1], [0, 0, 1, 1], [], []>} : vector<8x72xbf16>, vector<72x512xbf16>, vector<8x512xf32> -> vector<8x512xf32>
    %c0_17 = arith.constant 0 : index
    %c0_18 = arith.constant 0 : index
    %160 = vector.load %arg8[%c0_17, %c0_18] : memref<8x1xf32, #tpu.memory_space<vmem>>, vector<8x1xf32>
    %161 = vector.broadcast %160 : vector<8x1xf32> to vector<8x512xf32>
    %162 = arith.addf %159, %161 : vector<8x512xf32>
    %cst_19 = arith.constant 0.000000e+00 : f32
    %163 = vector.broadcast %cst_19 : f32 to vector<8x512xf32>
    %164 = arith.maximumf %162, %163 : vector<8x512xf32>
    %165 = arith.truncf %164 : vector<8x512xf32> to vector<8x512xbf16>
    %166 = vector.extract_strided_slice %165 {offsets = [0, 495], sizes = [8, 17], strides = [1, 1]} : vector<8x512xbf16> to vector<8x17xbf16>
    %167 = vector.extract_strided_slice %165 {offsets = [0, 0], sizes = [8, 495], strides = [1, 1]} : vector<8x512xbf16> to vector<8x495xbf16>
    %168 = tpu.concatenate %166, %167 in 1 : vector<8x17xbf16>, vector<8x495xbf16> -> vector<8x512xbf16>
    %169 = vector.broadcast %2 : vector<1x512xbf16> to vector<8x512xbf16>
    %170 = arith.mulf %168, %169 : vector<8x512xbf16>
    %171 = vector.extract_strided_slice %165 {offsets = [0, 496], sizes = [8, 16], strides = [1, 1]} : vector<8x512xbf16> to vector<8x16xbf16>
    %172 = vector.extract_strided_slice %165 {offsets = [0, 0], sizes = [8, 496], strides = [1, 1]} : vector<8x512xbf16> to vector<8x496xbf16>
    %173 = tpu.concatenate %171, %172 in 1 : vector<8x16xbf16>, vector<8x496xbf16> -> vector<8x512xbf16>
    %174 = vector.broadcast %3 : vector<1x512xbf16> to vector<8x512xbf16>
    %175 = arith.mulf %173, %174 : vector<8x512xbf16>
    %176 = vector.extract_strided_slice %165 {offsets = [0, 497], sizes = [8, 15], strides = [1, 1]} : vector<8x512xbf16> to vector<8x15xbf16>
    %177 = vector.extract_strided_slice %165 {offsets = [0, 0], sizes = [8, 497], strides = [1, 1]} : vector<8x512xbf16> to vector<8x497xbf16>
    %178 = tpu.concatenate %176, %177 in 1 : vector<8x15xbf16>, vector<8x497xbf16> -> vector<8x512xbf16>
    %179 = vector.broadcast %4 : vector<1x512xbf16> to vector<8x512xbf16>
    %180 = arith.mulf %178, %179 : vector<8x512xbf16>
    %181 = vector.extract_strided_slice %165 {offsets = [0, 511], sizes = [8, 1], strides = [1, 1]} : vector<8x512xbf16> to vector<8x1xbf16>
    %182 = vector.extract_strided_slice %165 {offsets = [0, 0], sizes = [8, 511], strides = [1, 1]} : vector<8x512xbf16> to vector<8x511xbf16>
    %183 = tpu.concatenate %181, %182 in 1 : vector<8x1xbf16>, vector<8x511xbf16> -> vector<8x512xbf16>
    %184 = vector.broadcast %5 : vector<1x512xbf16> to vector<8x512xbf16>
    %185 = arith.mulf %183, %184 : vector<8x512xbf16>
    %186 = vector.broadcast %6 : vector<1x512xbf16> to vector<8x512xbf16>
    %187 = arith.mulf %165, %186 : vector<8x512xbf16>
    %188 = vector.extract_strided_slice %165 {offsets = [0, 1], sizes = [8, 511], strides = [1, 1]} : vector<8x512xbf16> to vector<8x511xbf16>
    %189 = vector.extract_strided_slice %165 {offsets = [0, 0], sizes = [8, 1], strides = [1, 1]} : vector<8x512xbf16> to vector<8x1xbf16>
    %190 = tpu.concatenate %188, %189 in 1 : vector<8x511xbf16>, vector<8x1xbf16> -> vector<8x512xbf16>
    %191 = vector.broadcast %7 : vector<1x512xbf16> to vector<8x512xbf16>
    %192 = arith.mulf %190, %191 : vector<8x512xbf16>
    %193 = vector.extract_strided_slice %165 {offsets = [0, 15], sizes = [8, 497], strides = [1, 1]} : vector<8x512xbf16> to vector<8x497xbf16>
    %194 = vector.extract_strided_slice %165 {offsets = [0, 0], sizes = [8, 15], strides = [1, 1]} : vector<8x512xbf16> to vector<8x15xbf16>
    %195 = tpu.concatenate %193, %194 in 1 : vector<8x497xbf16>, vector<8x15xbf16> -> vector<8x512xbf16>
    %196 = vector.broadcast %8 : vector<1x512xbf16> to vector<8x512xbf16>
    %197 = arith.mulf %195, %196 : vector<8x512xbf16>
    %198 = vector.extract_strided_slice %165 {offsets = [0, 16], sizes = [8, 496], strides = [1, 1]} : vector<8x512xbf16> to vector<8x496xbf16>
    %199 = vector.extract_strided_slice %165 {offsets = [0, 0], sizes = [8, 16], strides = [1, 1]} : vector<8x512xbf16> to vector<8x16xbf16>
    %200 = tpu.concatenate %198, %199 in 1 : vector<8x496xbf16>, vector<8x16xbf16> -> vector<8x512xbf16>
    %201 = vector.broadcast %9 : vector<1x512xbf16> to vector<8x512xbf16>
    %202 = arith.mulf %200, %201 : vector<8x512xbf16>
    %203 = vector.extract_strided_slice %165 {offsets = [0, 17], sizes = [8, 495], strides = [1, 1]} : vector<8x512xbf16> to vector<8x495xbf16>
    %204 = vector.extract_strided_slice %165 {offsets = [0, 0], sizes = [8, 17], strides = [1, 1]} : vector<8x512xbf16> to vector<8x17xbf16>
    %205 = tpu.concatenate %203, %204 in 1 : vector<8x495xbf16>, vector<8x17xbf16> -> vector<8x512xbf16>
    %206 = vector.broadcast %10 : vector<1x512xbf16> to vector<8x512xbf16>
    %207 = arith.mulf %205, %206 : vector<8x512xbf16>
    %208 = tpu.concatenate %170, %175, %180, %185, %187, %192, %197, %202, %207 in 0 : vector<8x512xbf16>, vector<8x512xbf16>, vector<8x512xbf16>, vector<8x512xbf16>, vector<8x512xbf16>, vector<8x512xbf16>, vector<8x512xbf16>, vector<8x512xbf16>, vector<8x512xbf16> -> vector<72x512xbf16>
    %c0_20 = arith.constant 0 : index
    %c0_21 = arith.constant 0 : index
    %209 = vector.load %arg9[%c0_20, %c0_21] : memref<8x72xbf16, #tpu.memory_space<vmem>>, vector<8x72xbf16>
    %cst_22 = arith.constant dense<0.000000e+00> : vector<8x512xf32>
    %210 = tpu.matmul %209, %208, %cst_22 {dimension_numbers = #tpu.dot_dimension_numbers<[1], [0], [0], [1], [0, 0, 1, 1], [], []>} : vector<8x72xbf16>, vector<72x512xbf16>, vector<8x512xf32> -> vector<8x512xf32>
    %c0_23 = arith.constant 0 : index
    %c0_24 = arith.constant 0 : index
    %211 = vector.load %arg10[%c0_23, %c0_24] : memref<8x1xf32, #tpu.memory_space<vmem>>, vector<8x1xf32>
    %212 = vector.broadcast %211 : vector<8x1xf32> to vector<8x512xf32>
    %213 = arith.addf %210, %212 : vector<8x512xf32>
    %cst_25 = arith.constant 0.000000e+00 : f32
    %214 = vector.broadcast %cst_25 : f32 to vector<8x512xf32>
    %215 = arith.maximumf %213, %214 : vector<8x512xf32>
    %216 = vector.extract_strided_slice %11 {offsets = [0, 0], sizes = [1, 512], strides = [1, 1]} : vector<2x512xf32> to vector<1x512xf32>
    %217 = vector.shape_cast %216 : vector<1x512xf32> to vector<1x512xf32>
    %218 = vector.broadcast %217 : vector<1x512xf32> to vector<4x512xf32>
    %219 = vector.extract_strided_slice %11 {offsets = [1, 0], sizes = [1, 512], strides = [1, 1]} : vector<2x512xf32> to vector<1x512xf32>
    %220 = vector.shape_cast %219 : vector<1x512xf32> to vector<1x512xf32>
    %221 = vector.broadcast %220 : vector<1x512xf32> to vector<4x512xf32>
    %222 = tpu.concatenate %218, %221 in 0 : vector<4x512xf32>, vector<4x512xf32> -> vector<8x512xf32>
    %223 = arith.addf %215, %222 : vector<8x512xf32>
    %224 = arith.truncf %223 : vector<8x512xf32> to vector<8x512xbf16>
    %225 = vector.extract_strided_slice %224 {offsets = [0, 495], sizes = [8, 17], strides = [1, 1]} : vector<8x512xbf16> to vector<8x17xbf16>
    %226 = vector.extract_strided_slice %224 {offsets = [0, 0], sizes = [8, 495], strides = [1, 1]} : vector<8x512xbf16> to vector<8x495xbf16>
    %227 = tpu.concatenate %225, %226 in 1 : vector<8x17xbf16>, vector<8x495xbf16> -> vector<8x512xbf16>
    %228 = vector.broadcast %2 : vector<1x512xbf16> to vector<8x512xbf16>
    %229 = arith.mulf %227, %228 : vector<8x512xbf16>
    %230 = vector.extract_strided_slice %224 {offsets = [0, 496], sizes = [8, 16], strides = [1, 1]} : vector<8x512xbf16> to vector<8x16xbf16>
    %231 = vector.extract_strided_slice %224 {offsets = [0, 0], sizes = [8, 496], strides = [1, 1]} : vector<8x512xbf16> to vector<8x496xbf16>
    %232 = tpu.concatenate %230, %231 in 1 : vector<8x16xbf16>, vector<8x496xbf16> -> vector<8x512xbf16>
    %233 = vector.broadcast %3 : vector<1x512xbf16> to vector<8x512xbf16>
    %234 = arith.mulf %232, %233 : vector<8x512xbf16>
    %235 = vector.extract_strided_slice %224 {offsets = [0, 497], sizes = [8, 15], strides = [1, 1]} : vector<8x512xbf16> to vector<8x15xbf16>
    %236 = vector.extract_strided_slice %224 {offsets = [0, 0], sizes = [8, 497], strides = [1, 1]} : vector<8x512xbf16> to vector<8x497xbf16>
    %237 = tpu.concatenate %235, %236 in 1 : vector<8x15xbf16>, vector<8x497xbf16> -> vector<8x512xbf16>
    %238 = vector.broadcast %4 : vector<1x512xbf16> to vector<8x512xbf16>
    %239 = arith.mulf %237, %238 : vector<8x512xbf16>
    %240 = vector.extract_strided_slice %224 {offsets = [0, 511], sizes = [8, 1], strides = [1, 1]} : vector<8x512xbf16> to vector<8x1xbf16>
    %241 = vector.extract_strided_slice %224 {offsets = [0, 0], sizes = [8, 511], strides = [1, 1]} : vector<8x512xbf16> to vector<8x511xbf16>
    %242 = tpu.concatenate %240, %241 in 1 : vector<8x1xbf16>, vector<8x511xbf16> -> vector<8x512xbf16>
    %243 = vector.broadcast %5 : vector<1x512xbf16> to vector<8x512xbf16>
    %244 = arith.mulf %242, %243 : vector<8x512xbf16>
    %245 = vector.broadcast %6 : vector<1x512xbf16> to vector<8x512xbf16>
    %246 = arith.mulf %224, %245 : vector<8x512xbf16>
    %247 = vector.extract_strided_slice %224 {offsets = [0, 1], sizes = [8, 511], strides = [1, 1]} : vector<8x512xbf16> to vector<8x511xbf16>
    %248 = vector.extract_strided_slice %224 {offsets = [0, 0], sizes = [8, 1], strides = [1, 1]} : vector<8x512xbf16> to vector<8x1xbf16>
    %249 = tpu.concatenate %247, %248 in 1 : vector<8x511xbf16>, vector<8x1xbf16> -> vector<8x512xbf16>
    %250 = vector.broadcast %7 : vector<1x512xbf16> to vector<8x512xbf16>
    %251 = arith.mulf %249, %250 : vector<8x512xbf16>
    %252 = vector.extract_strided_slice %224 {offsets = [0, 15], sizes = [8, 497], strides = [1, 1]} : vector<8x512xbf16> to vector<8x497xbf16>
    %253 = vector.extract_strided_slice %224 {offsets = [0, 0], sizes = [8, 15], strides = [1, 1]} : vector<8x512xbf16> to vector<8x15xbf16>
    %254 = tpu.concatenate %252, %253 in 1 : vector<8x497xbf16>, vector<8x15xbf16> -> vector<8x512xbf16>
    %255 = vector.broadcast %8 : vector<1x512xbf16> to vector<8x512xbf16>
    %256 = arith.mulf %254, %255 : vector<8x512xbf16>
    %257 = vector.extract_strided_slice %224 {offsets = [0, 16], sizes = [8, 496], strides = [1, 1]} : vector<8x512xbf16> to vector<8x496xbf16>
    %258 = vector.extract_strided_slice %224 {offsets = [0, 0], sizes = [8, 16], strides = [1, 1]} : vector<8x512xbf16> to vector<8x16xbf16>
    %259 = tpu.concatenate %257, %258 in 1 : vector<8x496xbf16>, vector<8x16xbf16> -> vector<8x512xbf16>
    %260 = vector.broadcast %9 : vector<1x512xbf16> to vector<8x512xbf16>
    %261 = arith.mulf %259, %260 : vector<8x512xbf16>
    %262 = vector.extract_strided_slice %224 {offsets = [0, 17], sizes = [8, 495], strides = [1, 1]} : vector<8x512xbf16> to vector<8x495xbf16>
    %263 = vector.extract_strided_slice %224 {offsets = [0, 0], sizes = [8, 17], strides = [1, 1]} : vector<8x512xbf16> to vector<8x17xbf16>
    %264 = tpu.concatenate %262, %263 in 1 : vector<8x495xbf16>, vector<8x17xbf16> -> vector<8x512xbf16>
    %265 = vector.broadcast %10 : vector<1x512xbf16> to vector<8x512xbf16>
    %266 = arith.mulf %264, %265 : vector<8x512xbf16>
    %267 = tpu.concatenate %229, %234, %239, %244, %246, %251, %256, %261, %266 in 0 : vector<8x512xbf16>, vector<8x512xbf16>, vector<8x512xbf16>, vector<8x512xbf16>, vector<8x512xbf16>, vector<8x512xbf16>, vector<8x512xbf16>, vector<8x512xbf16>, vector<8x512xbf16> -> vector<72x512xbf16>
    %c0_26 = arith.constant 0 : index
    %c0_27 = arith.constant 0 : index
    %268 = vector.load %arg11[%c0_26, %c0_27] : memref<2x72xbf16, #tpu.memory_space<vmem>>, vector<2x72xbf16>
    %cst_28 = arith.constant dense<0.000000e+00> : vector<2x512xf32>
    %269 = tpu.matmul %268, %267, %cst_28 {dimension_numbers = #tpu.dot_dimension_numbers<[1], [0], [0], [1], [0, 0, 1, 1], [], []>} : vector<2x72xbf16>, vector<72x512xbf16>, vector<2x512xf32> -> vector<2x512xf32>
    %c0_29 = arith.constant 0 : index
    %c0_30 = arith.constant 0 : index
    %270 = vector.load %arg12[%c0_29, %c0_30] : memref<2x1xf32, #tpu.memory_space<vmem>>, vector<2x1xf32>
    %271 = vector.broadcast %270 : vector<2x1xf32> to vector<2x512xf32>
    %272 = arith.addf %269, %271 : vector<2x512xf32>
    %c0_31 = arith.constant 0 : index
    %c0_32 = arith.constant 0 : index
    %273 = vector.load %arg13[%c0_31, %c0_32] : memref<2x512xf32, #tpu.memory_space<vmem>>, vector<2x512xf32>
    tpu.vector_store %arg13[%c0_31, %c0_32], %272 {strides = array<i32>} : memref<2x512xf32, #tpu.memory_space<vmem>>, vector<2x512xf32>,
    return
  }
  func.func @transform_0(%arg0: i32) -> (i32, i32) {
    %c0_i32 = arith.constant 0 : i32
    %c0_i32_0 = arith.constant 0 : i32
    %c0_i32_1 = arith.constant 0 : i32
    return %c0_i32, %c0_i32_0 : i32, i32
  }
  func.func @transform_1(%arg0: i32) -> (i32, i32) {
    %c0_i32 = arith.constant 0 : i32
    %c0_i32_0 = arith.constant 0 : i32
    %c0_i32_1 = arith.constant 0 : i32
    return %c0_i32, %c0_i32_0 : i32, i32
  }
  func.func @transform_2(%arg0: i32) -> (i32, i32) {
    %c0_i32 = arith.constant 0 : i32
    %c0_i32_0 = arith.constant 0 : i32
    %c0_i32_1 = arith.constant 0 : i32
    return %c0_i32, %c0_i32_0 : i32, i32
  }
  func.func @transform_3(%arg0: i32) -> (i32, i32) {
    %c0_i32 = arith.constant 0 : i32
    %c0_i32_0 = arith.constant 0 : i32
    %c0_i32_1 = arith.constant 0 : i32
    return %c0_i32, %c0_i32_0 : i32, i32
  }
  func.func @transform_4(%arg0: i32) -> (i32, i32) {
    %c0_i32 = arith.constant 0 : i32
    %c0_i32_0 = arith.constant 0 : i32
    %c0_i32_1 = arith.constant 0 : i32
    return %c0_i32, %c0_i32_0 : i32, i32
  }
  func.func @transform_5(%arg0: i32) -> (i32, i32) {
    %c0_i32 = arith.constant 0 : i32
    %c0_i32_0 = arith.constant 0 : i32
    %c0_i32_1 = arith.constant 0 : i32
    return %c0_i32, %c0_i32_0 : i32, i32
  }
  func.func @transform_6(%arg0: i32) -> (i32, i32) {
    %c0_i32 = arith.constant 0 : i32
    %c0_i32_0 = arith.constant 0 : i32
    %c0_i32_1 = arith.constant 0 : i32
    return %c0_i32, %c0_i32_0 : i32, i32
  }
  func.func @transform_7(%arg0: i32) -> (i32, i32) {
    %c0_i32 = arith.constant 0 : i32
    %c0_i32_0 = arith.constant 0 : i32
    %c0_i32_1 = arith.constant 0 : i32
    return %c0_i32, %c0_i32_0 : i32, i32
  }
  func.func @transform_8(%arg0: i32) -> (i32, i32) {
    %c0_i32 = arith.constant 0 : i32
    %c0_i32_0 = arith.constant 0 : i32
    %c0_i32_1 = arith.constant 0 : i32
    return %c0_i32, %c0_i32_0 : i32, i32
  }
  func.func @transform_9(%arg0: i32) -> (i32, i32) {
    %c0_i32 = arith.constant 0 : i32
    %c0_i32_0 = arith.constant 0 : i32
    %c0_i32_1 = arith.constant 0 : i32
    return %c0_i32, %c0_i32_0 : i32, i32
  }
  func.func @transform_10(%arg0: i32) -> (i32, i32) {
    %c0_i32 = arith.constant 0 : i32
    %c0_i32_0 = arith.constant 0 : i32
    %c0_i32_1 = arith.constant 0 : i32
    return %c0_i32, %c0_i32_0 : i32, i32
  }
  func.func @transform_11(%arg0: i32) -> (i32, i32) {
    %c0_i32 = arith.constant 0 : i32
    %c0_i32_0 = arith.constant 0 : i32
    %c0_i32_1 = arith.constant 0 : i32
    return %c0_i32, %c0_i32_0 : i32, i32
  }
  func.func @transform_12(%arg0: i32) -> (i32, i32) {
    %c0_i32 = arith.constant 0 : i32
    %c0_i32_0 = arith.constant 0 : i32
    %c0_i32_1 = arith.constant 0 : i32
    return %c0_i32, %c0_i32_0 : i32, i32
  }
}

</mosaic_0001>

<llo_original>
// kernel: complex_resnet_forward.1
$region0: #{complex_resnet_forward.1}
  #allocation0 [shape = 'u32[]', space=smem, size = 0x4, offset = 0x4, fixed_abs, tag = 'smem constant byte address 0x4 - core index']
  #allocation1 [shape = 'u32[144,128]{1,0:T(1,128)}', space=vmem, size = 0x12000, scoped, tag = 'internal scratch']
  %s0 = inlined_call_operand.vmem [shape: f32[2,512], index: 0, kind: input, shape index: {}]
  %s1 = inlined_call_operand.vmem [shape: f32[9,512], index: 1, kind: input, shape index: {}]
  %s2 = inlined_call_operand.vmem [shape: bf16[8,18], index: 2, kind: input, shape index: {}]
  %s3 = inlined_call_operand.vmem [shape: f32[8,1], index: 3, kind: input, shape index: {}]
  %s4 = inlined_call_operand.vmem [shape: bf16[8,72], index: 4, kind: input, shape index: {}]
  %s5 = inlined_call_operand.vmem [shape: f32[8,1], index: 5, kind: input, shape index: {}]
  %s6 = inlined_call_operand.vmem [shape: bf16[8,72], index: 6, kind: input, shape index: {}]
  %s7 = inlined_call_operand.vmem [shape: f32[8,1], index: 7, kind: input, shape index: {}]
  %s8 = inlined_call_operand.vmem [shape: bf16[8,72], index: 8, kind: input, shape index: {}]
  %s9 = inlined_call_operand.vmem [shape: f32[8,1], index: 9, kind: input, shape index: {}]
  %s10 = inlined_call_operand.vmem [shape: bf16[2,72], index: 10, kind: input, shape index: {}]
  %s11 = inlined_call_operand.vmem [shape: f32[2,1], index: 11, kind: input, shape index: {}]
  %s12 = inlined_call_operand.vmem [shape: f32[2,512], index: 12, kind: output, shape index: {}]
  %s13 = sld [smem:[#allocation0]]
  $region58: #{complex_resnet_forward.1} parent=0
    _
  %s15 = ssub.s32 1, %s13
  %s16 = scalar_select 0, %s15, %s13
  // Predicated region
  $region2: #{complex_resnet_forward.1} parent=0 // pred_check
    _
  $region3: #{complex_resnet_forward.1} parent=0 // pred_check_branch
    %18 = sbr.rel (0) target = $region5
  $region4: #{complex_resnet_forward.1} parent=0 // pred_region
    _
  $region5: #{complex_resnet_forward.1} parent=0 // pred_fallthru
    _
  // Predicated region
  $region6: #{complex_resnet_forward.1} parent=0 // pred_check
    _
  $region7: #{complex_resnet_forward.1} parent=0 // pred_check_branch
    %20 = sbr.rel (0) target = $region9
  $region8: #{complex_resnet_forward.1} parent=0 // pred_region
    _
  $region9: #{complex_resnet_forward.1} parent=0 // pred_fallthru
    _
  // Predicated region
  $region10: #{complex_resnet_forward.1} parent=0 // pred_check
    _
  $region11: #{complex_resnet_forward.1} parent=0 // pred_check_branch
    %22 = sbr.rel (0) target = $region13
  $region12: #{complex_resnet_forward.1} parent=0 // pred_region
    _
  $region13: #{complex_resnet_forward.1} parent=0 // pred_fallthru
    _
  // Predicated region
  $region14: #{complex_resnet_forward.1} parent=0 // pred_check
    _
  $region15: #{complex_resnet_forward.1} parent=0 // pred_check_branch
    %24 = sbr.rel (0) target = $region17
  $region16: #{complex_resnet_forward.1} parent=0 // pred_region
    _
  $region17: #{complex_resnet_forward.1} parent=0 // pred_fallthru
    _
  // Predicated region
  $region18: #{complex_resnet_forward.1} parent=0 // pred_check
    _
  $region19: #{complex_resnet_forward.1} parent=0 // pred_check_branch
    %26 = sbr.rel (0) target = $region21
  $region20: #{complex_resnet_forward.1} parent=0 // pred_region
    _
  $region21: #{complex_resnet_forward.1} parent=0 // pred_fallthru
    _
  // Predicated region
  $region22: #{complex_resnet_forward.1} parent=0 // pred_check
    _
  $region23: #{complex_resnet_forward.1} parent=0 // pred_check_branch
    %28 = sbr.rel (0) target = $region25
  $region24: #{complex_resnet_forward.1} parent=0 // pred_region
    _
  $region25: #{complex_resnet_forward.1} parent=0 // pred_fallthru
    _
  // Predicated region
  $region26: #{complex_resnet_forward.1} parent=0 // pred_check
    _
  $region27: #{complex_resnet_forward.1} parent=0 // pred_check_branch
    %30 = sbr.rel (0) target = $region29
  $region28: #{complex_resnet_forward.1} parent=0 // pred_region
    _
  $region29: #{complex_resnet_forward.1} parent=0 // pred_fallthru
    _
  // Predicated region
  $region30: #{complex_resnet_forward.1} parent=0 // pred_check
    _
  $region31: #{complex_resnet_forward.1} parent=0 // pred_check_branch
    %32 = sbr.rel (0) target = $region33
  $region32: #{complex_resnet_forward.1} parent=0 // pred_region
    _
  $region33: #{complex_resnet_forward.1} parent=0 // pred_fallthru
    _
  // Predicated region
  $region34: #{complex_resnet_forward.1} parent=0 // pred_check
    _
  $region35: #{complex_resnet_forward.1} parent=0 // pred_check_branch
    %34 = sbr.rel (0) target = $region37
  $region36: #{complex_resnet_forward.1} parent=0 // pred_region
    _
  $region37: #{complex_resnet_forward.1} parent=0 // pred_fallthru
    _
  // Predicated region
  $region38: #{complex_resnet_forward.1} parent=0 // pred_check
    _
  $region39: #{complex_resnet_forward.1} parent=0 // pred_check_branch
    %36 = sbr.rel (0) target = $region41
  $region40: #{complex_resnet_forward.1} parent=0 // pred_region
    _
  $region41: #{complex_resnet_forward.1} parent=0 // pred_fallthru
    _
  // Predicated region
  $region42: #{complex_resnet_forward.1} parent=0 // pred_check
    _
  $region43: #{complex_resnet_forward.1} parent=0 // pred_check_branch
    %38 = sbr.rel (0) target = $region45
  $region44: #{complex_resnet_forward.1} parent=0 // pred_region
    _
  $region45: #{complex_resnet_forward.1} parent=0 // pred_fallthru
    _
  // Predicated region
  $region46: #{complex_resnet_forward.1} parent=0 // pred_check
    _
  $region47: #{complex_resnet_forward.1} parent=0 // pred_check_branch
    %40 = sbr.rel (0) target = $region49
  $region48: #{complex_resnet_forward.1} parent=0 // pred_region
    _
  $region49: #{complex_resnet_forward.1} parent=0 // pred_fallthru
    _
  %v42 = vld [vmem:[%s1] sm:$0xff]
  %v43 = vld [vmem:[%s1 + $0x8] sm:$0xff]
  %v44 = vld [vmem:[%s1 + $0x10] sm:$0xff]
  %v45 = vld [vmem:[%s1 + $0x18] sm:$0xff]
  %v46 = vld [vmem:[%s1 + $0x20] sm:$0x1]
  %v47 = vld [vmem:[%s1 + $0x28] sm:$0x1]
  %v48 = vld [vmem:[%s1 + $0x30] sm:$0x1]
  %v49 = vld [vmem:[%s1 + $0x38] sm:$0x1]
  %v50 = vpack.c.bf16 %v46, %v42
  %v51 = vpack.c.bf16 %v47, %v43
  %v52 = vpack.c.bf16 %v48, %v44
  %v53 = vpack.c.bf16 %v49, %v45
  %v54 = vld [vmem:[%s0] sm:$0xff]
  %v56 = vcombine.high %v54, %v54
  %v58 = vunpack.c.l.s4 1983009808
  %v59 = vunpack.c.0.s8 %v58
  %v60 = vlaneseq
  %v61 = vshrl.u32 %v60, 7
  %v62 = vsub.s32 %v59, %v61
  %v63 = vrot.slane %v54, %v62
  %v65 = vunpack.c.l.s4 1983009808
  %v66 = vunpack.c.0.s8 %v65
  %v67 = vlaneseq
  %v68 = vshrl.u32 %v67, 7
  %v69 = vsub.s32 %v66, %v68
  %v70 = vrot.slane %v56, %v69
  %v71 = vcombine.high %v63, %v63
  %v72 = vcombine.high %v70, %v70
  %v77 = vpack.c.bf16 %v63, %v63
  %v78 = vpack.c.bf16 %v71, %v71
  %v79 = vpack.c.bf16 %v70, %v70
  %v80 = vpack.c.bf16 %v72, %v72
  %82 = vrot.lane.b32.xlu0 %v80, 17
  %v83 = vpop.permute.xlu0 %82
  %87 = vrot.lane.b32.xlu0 %v77, 17
  %v88 = vpop.permute.xlu0 %87
  %89 = vrot.lane.b32.xlu0 %v78, 17
  %v90 = vpop.permute.xlu0 %89
  %91 = vrot.lane.b32.xlu0 %v79, 17
  %v92 = vpop.permute.xlu0 %91
  %vm93 = vcmask 138240
  %v94 = vsel %vm93, %v88, %v90
  %v95 = vsel %vm93, %v90, %v92
  %v96 = vsel %vm93, %v92, %v83
  %vm100 = vcmask 138240
  %v103 = vsel %vm100, %v83, %v88
  %v106 = vpack.i.b16 %v50, %v50
  %v108 = vlaneseq
  %v109 = vshrl.u32 %v108, 7
  %v110 = vsub.s32 0, %v109
  %v111 = vrot.slane %v106, %v110
  %v113 = vpack.i.b16 %v51, %v51
  %v115 = vlaneseq
  %v116 = vshrl.u32 %v115, 7
  %v117 = vsub.s32 0, %v116
  %v118 = vrot.slane %v113, %v117
  %v120 = vpack.i.b16 %v52, %v52
  %v122 = vlaneseq
  %v123 = vshrl.u32 %v122, 7
  %v124 = vsub.s32 0, %v123
  %v125 = vrot.slane %v120, %v124
  %v127 = vpack.i.b16 %v53, %v53
  %v129 = vlaneseq
  %v130 = vshrl.u32 %v129, 7
  %v131 = vsub.s32 0, %v130
  %v132 = vrot.slane %v127, %v131
  %v133 = vmul.bf16 %v103, %v111
  %v134 = vmul.bf16 %v94, %v118
  %v135 = vmul.bf16 %v95, %v125
  %v136 = vmul.bf16 %v96, %v132
  %137 = vrot.lane.b32.xlu0 %v80, 16
  %v138 = vpop.permute.xlu0 %137
  %139 = vrot.lane.b32.xlu0 %v77, 16
  %v140 = vpop.permute.xlu0 %139
  %141 = vrot.lane.b32.xlu0 %v78, 16
  %v142 = vpop.permute.xlu0 %141
  %143 = vrot.lane.b32.xlu0 %v79, 16
  %v144 = vpop.permute.xlu0 %143
  %vm145 = vcmask 130048
  %v146 = vsel %vm145, %v140, %v142
  %v147 = vsel %vm145, %v142, %v144
  %v148 = vsel %vm145, %v144, %v138
  %vm152 = vcmask 130048
  %v155 = vsel %vm152, %v138, %v140
  %v157 = vshrl.u32 %v50, 16
  %v158 = vpack.i.b16 %v157, %v157
  %v160 = vlaneseq
  %v161 = vshrl.u32 %v160, 7
  %v162 = vsub.s32 0, %v161
  %v163 = vrot.slane %v158, %v162
  %v164 = vshrl.u32 %v51, 16
  %v165 = vpack.i.b16 %v164, %v164
  %v167 = vlaneseq
  %v168 = vshrl.u32 %v167, 7
  %v169 = vsub.s32 0, %v168
  %v170 = vrot.slane %v165, %v169
  %v171 = vshrl.u32 %v52, 16
  %v172 = vpack.i.b16 %v171, %v171
  %v174 = vlaneseq
  %v175 = vshrl.u32 %v174, 7
  %v176 = vsub.s32 0, %v175
  %v177 = vrot.slane %v172, %v176
  %v178 = vshrl.u32 %v53, 16
  %v179 = vpack.i.b16 %v178, %v178
  %v181 = vlaneseq
  %v182 = vshrl.u32 %v181, 7
  %v183 = vsub.s32 0, %v182
  %v184 = vrot.slane %v179, %v183
  %v185 = vmul.bf16 %v155, %v163
  %v186 = vmul.bf16 %v146, %v170
  %v187 = vmul.bf16 %v147, %v177
  %v188 = vmul.bf16 %v148, %v184
  %189 = vrot.lane.b32.xlu0 %v80, 15
  %v190 = vpop.permute.xlu0 %189
  %191 = vrot.lane.b32.xlu0 %v77, 15
  %v192 = vpop.permute.xlu0 %191
  %193 = vrot.lane.b32.xlu0 %v78, 15
  %v194 = vpop.permute.xlu0 %193
  %195 = vrot.lane.b32.xlu0 %v79, 15
  %v196 = vpop.permute.xlu0 %195
  %vm197 = vcmask 121856
  %v198 = vsel %vm197, %v192, %v194
  %v199 = vsel %vm197, %v194, %v196
  %v200 = vsel %vm197, %v196, %v190
  %vm204 = vcmask 121856
  %v207 = vsel %vm204, %v190, %v192
  %v209 = vlaneseq
  %v210 = vshrl.u32 %v209, 7
  %v211 = vsub.s32 1, %v210
  %v212 = vrot.slane %v106, %v211
  %v213 = vlaneseq
  %v214 = vshrl.u32 %v213, 7
  %v215 = vsub.s32 1, %v214
  %v216 = vrot.slane %v113, %v215
  %v217 = vlaneseq
  %v218 = vshrl.u32 %v217, 7
  %v219 = vsub.s32 1, %v218
  %v220 = vrot.slane %v120, %v219
  %v221 = vlaneseq
  %v222 = vshrl.u32 %v221, 7
  %v223 = vsub.s32 1, %v222
  %v224 = vrot.slane %v127, %v223
  %v225 = vmul.bf16 %v207, %v212
  %v226 = vmul.bf16 %v198, %v216
  %v227 = vmul.bf16 %v199, %v220
  %v228 = vmul.bf16 %v200, %v224
  %229 = vrot.lane.b32.xlu0 %v80, 1
  %v230 = vpop.permute.xlu0 %229
  %231 = vrot.lane.b32.xlu0 %v77, 1
  %v232 = vpop.permute.xlu0 %231
  %233 = vrot.lane.b32.xlu0 %v78, 1
  %v234 = vpop.permute.xlu0 %233
  %235 = vrot.lane.b32.xlu0 %v79, 1
  %v236 = vpop.permute.xlu0 %235
  %vm237 = vcmask 7168
  %v238 = vsel %vm237, %v232, %v234
  %v239 = vsel %vm237, %v234, %v236
  %v240 = vsel %vm237, %v236, %v230
  %vm244 = vcmask 7168
  %v247 = vsel %vm244, %v230, %v232
  %v249 = vlaneseq
  %v250 = vshrl.u32 %v249, 7
  %v251 = vsub.s32 1, %v250
  %v252 = vrot.slane %v158, %v251
  %v253 = vlaneseq
  %v254 = vshrl.u32 %v253, 7
  %v255 = vsub.s32 1, %v254
  %v256 = vrot.slane %v165, %v255
  %v257 = vlaneseq
  %v258 = vshrl.u32 %v257, 7
  %v259 = vsub.s32 1, %v258
  %v260 = vrot.slane %v172, %v259
  %v261 = vlaneseq
  %v262 = vshrl.u32 %v261, 7
  %v263 = vsub.s32 1, %v262
  %v264 = vrot.slane %v179, %v263
  %v265 = vmul.bf16 %v247, %v252
  %v266 = vmul.bf16 %v238, %v256
  %v267 = vmul.bf16 %v239, %v260
  %v268 = vmul.bf16 %v240, %v264
  %v269 = vlaneseq
  %v270 = vshrl.u32 %v269, 7
  %v271 = vsub.s32 2, %v270
  %v272 = vrot.slane %v106, %v271
  %v273 = vlaneseq
  %v274 = vshrl.u32 %v273, 7
  %v275 = vsub.s32 2, %v274
  %v276 = vrot.slane %v113, %v275
  %v277 = vlaneseq
  %v278 = vshrl.u32 %v277, 7
  %v279 = vsub.s32 2, %v278
  %v280 = vrot.slane %v120, %v279
  %v281 = vlaneseq
  %v282 = vshrl.u32 %v281, 7
  %v283 = vsub.s32 2, %v282
  %v284 = vrot.slane %v127, %v283
  %v285 = vmul.bf16 %v77, %v272
  %v286 = vmul.bf16 %v78, %v276
  %v287 = vmul.bf16 %v79, %v280
  %v288 = vmul.bf16 %v80, %v284
  %289 = vrot.lane.b32.xlu0 %v77, 127
  %v290 = vpop.permute.xlu0 %289
  %291 = vrot.lane.b32.xlu0 %v78, 127
  %v292 = vpop.permute.xlu0 %291
  %293 = vrot.lane.b32.xlu0 %v79, 127
  %v294 = vpop.permute.xlu0 %293
  %295 = vrot.lane.b32.xlu0 %v80, 127
  %v296 = vpop.permute.xlu0 %295
  %vm297 = vcmask 1039360
  %v298 = vsel %vm297, %v290, %v292
  %v299 = vsel %vm297, %v292, %v294
  %v300 = vsel %vm297, %v294, %v296
  %vm304 = vcmask 1039360
  %v307 = vsel %vm304, %v296, %v290
  %v309 = vlaneseq
  %v310 = vshrl.u32 %v309, 7
  %v311 = vsub.s32 2, %v310
  %v312 = vrot.slane %v158, %v311
  %v313 = vlaneseq
  %v314 = vshrl.u32 %v313, 7
  %v315 = vsub.s32 2, %v314
  %v316 = vrot.slane %v165, %v315
  %v317 = vlaneseq
  %v318 = vshrl.u32 %v317, 7
  %v319 = vsub.s32 2, %v318
  %v320 = vrot.slane %v172, %v319
  %v321 = vlaneseq
  %v322 = vshrl.u32 %v321, 7
  %v323 = vsub.s32 2, %v322
  %v324 = vrot.slane %v179, %v323
  %v325 = vmul.bf16 %v298, %v312
  %v326 = vmul.bf16 %v299, %v316
  %v327 = vmul.bf16 %v300, %v320
  %v328 = vmul.bf16 %v307, %v324
  %329 = vrot.lane.b32.xlu0 %v77, 113
  %v330 = vpop.permute.xlu0 %329
  %331 = vrot.lane.b32.xlu0 %v78, 113
  %v332 = vpop.permute.xlu0 %331
  %333 = vrot.lane.b32.xlu0 %v79, 113
  %v334 = vpop.permute.xlu0 %333
  %335 = vrot.lane.b32.xlu0 %v80, 113
  %v336 = vpop.permute.xlu0 %335
  %vm337 = vcmask 924672
  %v338 = vsel %vm337, %v330, %v332
  %v339 = vsel %vm337, %v332, %v334
  %v340 = vsel %vm337, %v334, %v336
  %vm344 = vcmask 924672
  %v347 = vsel %vm344, %v336, %v330
  %v349 = vlaneseq
  %v350 = vshrl.u32 %v349, 7
  %v351 = vsub.s32 3, %v350
  %v352 = vrot.slane %v106, %v351
  %v353 = vlaneseq
  %v354 = vshrl.u32 %v353, 7
  %v355 = vsub.s32 3, %v354
  %v356 = vrot.slane %v113, %v355
  %v357 = vlaneseq
  %v358 = vshrl.u32 %v357, 7
  %v359 = vsub.s32 3, %v358
  %v360 = vrot.slane %v120, %v359
  %v361 = vlaneseq
  %v362 = vshrl.u32 %v361, 7
  %v363 = vsub.s32 3, %v362
  %v364 = vrot.slane %v127, %v363
  %v365 = vmul.bf16 %v338, %v352
  %v366 = vmul.bf16 %v339, %v356
  %v367 = vmul.bf16 %v340, %v360
  %v368 = vmul.bf16 %v347, %v364
  %369 = vrot.lane.b32.xlu0 %v77, 112
  %v370 = vpop.permute.xlu0 %369
  %371 = vrot.lane.b32.xlu0 %v78, 112
  %v372 = vpop.permute.xlu0 %371
  %373 = vrot.lane.b32.xlu0 %v79, 112
  %v374 = vpop.permute.xlu0 %373
  %375 = vrot.lane.b32.xlu0 %v80, 112
  %v376 = vpop.permute.xlu0 %375
  %vm377 = vcmask 916480
  %v378 = vsel %vm377, %v370, %v372
  %v379 = vsel %vm377, %v372, %v374
  %v380 = vsel %vm377, %v374, %v376
  %vm384 = vcmask 916480
  %v387 = vsel %vm384, %v376, %v370
  %v389 = vlaneseq
  %v390 = vshrl.u32 %v389, 7
  %v391 = vsub.s32 3, %v390
  %v392 = vrot.slane %v158, %v391
  %v393 = vlaneseq
  %v394 = vshrl.u32 %v393, 7
  %v395 = vsub.s32 3, %v394
  %v396 = vrot.slane %v165, %v395
  %v397 = vlaneseq
  %v398 = vshrl.u32 %v397, 7
  %v399 = vsub.s32 3, %v398
  %v400 = vrot.slane %v172, %v399
  %v401 = vlaneseq
  %v402 = vshrl.u32 %v401, 7
  %v403 = vsub.s32 3, %v402
  %v404 = vrot.slane %v179, %v403
  %v405 = vmul.bf16 %v378, %v392
  %v406 = vmul.bf16 %v379, %v396
  %v407 = vmul.bf16 %v380, %v400
  %v408 = vmul.bf16 %v387, %v404
  %409 = vrot.lane.b32.xlu0 %v77, 111
  %v410 = vpop.permute.xlu0 %409
  %411 = vrot.lane.b32.xlu0 %v78, 111
  %v412 = vpop.permute.xlu0 %411
  %413 = vrot.lane.b32.xlu0 %v79, 111
  %v414 = vpop.permute.xlu0 %413
  %415 = vrot.lane.b32.xlu0 %v80, 111
  %v416 = vpop.permute.xlu0 %415
  %vm417 = vcmask 908288
  %v418 = vsel %vm417, %v410, %v412
  %v419 = vsel %vm417, %v412, %v414
  %v420 = vsel %vm417, %v414, %v416
  %vm424 = vcmask 908288
  %v427 = vsel %vm424, %v416, %v410
  %v429 = vlaneseq
  %v430 = vshrl.u32 %v429, 7
  %v431 = vsub.s32 4, %v430
  %v432 = vrot.slane %v106, %v431
  %v433 = vlaneseq
  %v434 = vshrl.u32 %v433, 7
  %v435 = vsub.s32 4, %v434
  %v436 = vrot.slane %v113, %v435
  %v437 = vlaneseq
  %v438 = vshrl.u32 %v437, 7
  %v439 = vsub.s32 4, %v438
  %v440 = vrot.slane %v120, %v439
  %v441 = vlaneseq
  %v442 = vshrl.u32 %v441, 7
  %v443 = vsub.s32 4, %v442
  %v444 = vrot.slane %v127, %v443
  %v445 = vmul.bf16 %v418, %v432
  %v446 = vmul.bf16 %v419, %v436
  %v447 = vmul.bf16 %v420, %v440
  %v448 = vmul.bf16 %v427, %v444
  %v453 = vrot.slane %v185, 7
  %v454 = vrot.slane %v186, 7
  %v455 = vrot.slane %v187, 7
  %v456 = vrot.slane %v188, 7
  %v461 = vrot.slane %v225, 6
  %v462 = vrot.slane %v226, 6
  %v463 = vrot.slane %v227, 6
  %v464 = vrot.slane %v228, 6
  %v469 = vrot.slane %v265, 5
  %v470 = vrot.slane %v266, 5
  %v471 = vrot.slane %v267, 5
  %v472 = vrot.slane %v268, 5
  %v477 = vrot.slane %v285, 4
  %v478 = vrot.slane %v286, 4
  %v479 = vrot.slane %v287, 4
  %v480 = vrot.slane %v288, 4
  %v485 = vrot.slane %v325, 3
  %v486 = vrot.slane %v326, 3
  %v487 = vrot.slane %v327, 3
  %v488 = vrot.slane %v328, 3
  %v493 = vrot.slane %v365, 2
  %v494 = vrot.slane %v366, 2
  %v495 = vrot.slane %v367, 2
  %v496 = vrot.slane %v368, 2
  %v501 = vrot.slane %v405, 1
  %v502 = vrot.slane %v406, 1
  %v503 = vrot.slane %v407, 1
  %v504 = vrot.slane %v408, 1
  %vm505 = vcmask 1040384
  %v508 = vsel %vm505, %v133, %v453
  %v511 = vsel %vm505, %v134, %v454
  %v514 = vsel %vm505, %v135, %v455
  %v517 = vsel %vm505, %v136, %v456
  %vm518 = vcmask 1041408
  %v520 = vsel %vm518, %v508, %v461
  %v522 = vsel %vm518, %v511, %v462
  %v524 = vsel %vm518, %v514, %v463
  %v526 = vsel %vm518, %v517, %v464
  %vm527 = vcmask 1042432
  %v529 = vsel %vm527, %v520, %v469
  %v531 = vsel %vm527, %v522, %v470
  %v533 = vsel %vm527, %v524, %v471
  %v535 = vsel %vm527, %v526, %v472
  %vm536 = vcmask 1043456
  %v538 = vsel %vm536, %v529, %v477
  %v540 = vsel %vm536, %v531, %v478
  %v542 = vsel %vm536, %v533, %v479
  %v544 = vsel %vm536, %v535, %v480
  %vm545 = vcmask 1044480
  %v547 = vsel %vm545, %v538, %v485
  %v549 = vsel %vm545, %v540, %v486
  %v551 = vsel %vm545, %v542, %v487
  %v553 = vsel %vm545, %v544, %v488
  %vm554 = vcmask 1045504
  %v556 = vsel %vm554, %v547, %v493
  %v558 = vsel %vm554, %v549, %v494
  %v560 = vsel %vm554, %v551, %v495
  %v562 = vsel %vm554, %v553, %v496
  %vm563 = vcmask 1046528
  %v565 = vsel %vm563, %v556, %v501
  %v568 = vsel %vm563, %v558, %v502
  %v571 = vsel %vm563, %v560, %v503
  %v574 = vsel %vm563, %v562, %v504
  %v576 = vld [vmem:[%s2] sm:$0xf]
  %v577 = vld [vmem:[%s3] sm:$0xff]
  %579 = vset.pattern.permute.xlu0 0
  %580 = vperm.xlu0 %579, %v577
  %v581 = vpop.permute.xlu0 %580
  %vm583 = vcmask 146432
  %v585 = vsel %vm583, %v576, 0
  %v588 = vsel %vm505, %v445, 0
  %v591 = vsel %vm505, %v446, 0
  %v594 = vsel %vm505, %v447, 0
  %v597 = vsel %vm505, %v448, 0
  %599 = vmatprep.subr.bf16.mxu0 %v568
  %600 = vmatpush1.bf16.msra.mxu0 %v565
  %601 = vmatprep.subr.bf16.mxu0 %v591
  %602 = vmatpush1.bf16.msra.mxu0 %v588
  %603 = vmatprep.subr.bf16.mxu0 0
  %604 = vmatpush1.bf16.msra.mxu0 0
  %605 = vmatprep.subr.bf16.mxu0 0
  %606 = vmatpush1.bf16.msra.mxu0 0
  %607 = vmatprep.subr.bf16.mxu0 0
  %608 = vmatpush1.bf16.msra.mxu0 0
  %609 = vmatprep.subr.bf16.mxu0 0
  %610 = vmatpush1.bf16.msra.mxu0 0
  %611 = vmatprep.subr.bf16.mxu0 0
  %612 = vmatpush1.bf16.msra.mxu0 0
  %613 = vmatprep.subr.bf16.mxu0 0
  %614 = vmatpush1.bf16.msra.mxu0 0
  %615 = vmatprep.subr.bf16.mxu0 0
  %616 = vmatpush1.bf16.msra.mxu0 0
  %617 = vmatprep.subr.bf16.mxu0 0
  %618 = vmatpush1.bf16.msra.mxu0 0
  %619 = vmatprep.subr.bf16.mxu0 0
  %620 = vmatpush1.bf16.msra.mxu0 0
  %621 = vmatprep.subr.bf16.mxu0 0
  %622 = vmatpush1.bf16.msra.mxu0 0
  %623 = vmatprep.subr.bf16.mxu0 0
  %624 = vmatpush1.bf16.msra.mxu0 0
  %625 = vmatprep.subr.bf16.mxu0 0
  %626 = vmatpush1.bf16.msra.mxu0 0
  %627 = vmatprep.subr.bf16.mxu0 0
  %628 = vmatpush1.bf16.msra.mxu0 0
  %629 = vmatprep.subr.bf16.mxu0 0
  %630 = vmatpush1.bf16.msra.mxu0 0
  %631 = vmatprep.mubr.bf16.mxu0 0
  %632 = vmatmul.mubr.bf16.gmra.mrb[0].mxu0 %v585
  %v633 = vpop.f32.mrb[0].mxu0
  %v634 = vadd.f32 %v581, %v633
  %v635 = vpop.f32.mrb[0].mxu0
  %v636 = vadd.f32 %v581, %v635
  %v637 = vpop.f32.mrb[0].mxu0
  %v638 = vpop.f32.mrb[0].mxu0
  %639 = vdwg.mxu0
  %640 = vmatprep.subr.bf16.mxu0 %v574
  %641 = vmatpush1.bf16.msra.mxu0 %v571
  %642 = vmatprep.subr.bf16.mxu0 %v597
  %643 = vmatpush1.bf16.msra.mxu0 %v594
  %644 = vmatprep.subr.bf16.mxu0 0
  %645 = vmatpush1.bf16.msra.mxu0 0
  %646 = vmatprep.subr.bf16.mxu0 0
  %647 = vmatpush1.bf16.msra.mxu0 0
  %648 = vmatprep.subr.bf16.mxu0 0
  %649 = vmatpush1.bf16.msra.mxu0 0
  %650 = vmatprep.subr.bf16.mxu0 0
  %651 = vmatpush1.bf16.msra.mxu0 0
  %652 = vmatprep.subr.bf16.mxu0 0
  %653 = vmatpush1.bf16.msra.mxu0 0
  %654 = vmatprep.subr.bf16.mxu0 0
  %655 = vmatpush1.bf16.msra.mxu0 0
  %656 = vmatprep.subr.bf16.mxu0 0
  %657 = vmatpush1.bf16.msra.mxu0 0
  %658 = vmatprep.subr.bf16.mxu0 0
  %659 = vmatpush1.bf16.msra.mxu0 0
  %660 = vmatprep.subr.bf16.mxu0 0
  %661 = vmatpush1.bf16.msra.mxu0 0
  %662 = vmatprep.subr.bf16.mxu0 0
  %663 = vmatpush1.bf16.msra.mxu0 0
  %664 = vmatprep.subr.bf16.mxu0 0
  %665 = vmatpush1.bf16.msra.mxu0 0
  %666 = vmatprep.subr.bf16.mxu0 0
  %667 = vmatpush1.bf16.msra.mxu0 0
  %668 = vmatprep.subr.bf16.mxu0 0
  %669 = vmatpush1.bf16.msra.mxu0 0
  %670 = vmatprep.subr.bf16.mxu0 0
  %671 = vmatpush1.bf16.msra.mxu0 0
  %672 = vmatprep.mubr.bf16.mxu0 0
  %673 = vmatmul.mubr.bf16.gmra.mrb[0].mxu0 %v585
  %v674 = vpop.f32.mrb[0].mxu0
  %v675 = vadd.f32 %v581, %v674
  %v676 = vpop.f32.mrb[0].mxu0
  %v677 = vadd.f32 %v581, %v676
  %v678 = vpop.f32.mrb[0].mxu0
  %v679 = vpop.f32.mrb[0].mxu0
  %680 = vdwg.mxu0
  %v681 = vmax.f32 %v634, 0.0
  %v682 = vmax.f32 %v636, 0.0
  %v683 = vmax.f32 %v675, 0.0
  %v684 = vmax.f32 %v677, 0.0
  %v685 = vpack.c.bf16 %v681, %v681
  %v686 = vpack.c.bf16 %v682, %v682
  %v687 = vpack.c.bf16 %v683, %v683
  %v688 = vpack.c.bf16 %v684, %v684
  %690 = vrot.lane.b32.xlu0 %v688, 17
  %v691 = vpop.permute.xlu0 %690
  %695 = vrot.lane.b32.xlu0 %v685, 17
  %v696 = vpop.permute.xlu0 %695
  %697 = vrot.lane.b32.xlu0 %v686, 17
  %v698 = vpop.permute.xlu0 %697
  %699 = vrot.lane.b32.xlu0 %v687, 17
  %v700 = vpop.permute.xlu0 %699
  %v701 = vsel %vm93, %v696, %v698
  %v702 = vsel %vm93, %v698, %v700
  %v703 = vsel %vm93, %v700, %v691
  %v709 = vsel %vm100, %v691, %v696
  %v711 = vmul.bf16 %v709, %v111
  %v712 = vmul.bf16 %v701, %v118
  %v713 = vmul.bf16 %v702, %v125
  %v714 = vmul.bf16 %v703, %v132
  %715 = vrot.lane.b32.xlu0 %v688, 16
  %v716 = vpop.permute.xlu0 %715
  %717 = vrot.lane.b32.xlu0 %v685, 16
  %v718 = vpop.permute.xlu0 %717
  %719 = vrot.lane.b32.xlu0 %v686, 16
  %v720 = vpop.permute.xlu0 %719
  %721 = vrot.lane.b32.xlu0 %v687, 16
  %v722 = vpop.permute.xlu0 %721
  %v723 = vsel %vm145, %v718, %v720
  %v724 = vsel %vm145, %v720, %v722
  %v725 = vsel %vm145, %v722, %v716
  %v731 = vsel %vm152, %v716, %v718
  %v733 = vmul.bf16 %v731, %v163
  %v734 = vmul.bf16 %v723, %v170
  %v735 = vmul.bf16 %v724, %v177
  %v736 = vmul.bf16 %v725, %v184
  %737 = vrot.lane.b32.xlu0 %v688, 15
  %v738 = vpop.permute.xlu0 %737
  %739 = vrot.lane.b32.xlu0 %v685, 15
  %v740 = vpop.permute.xlu0 %739
  %741 = vrot.lane.b32.xlu0 %v686, 15
  %v742 = vpop.permute.xlu0 %741
  %743 = vrot.lane.b32.xlu0 %v687, 15
  %v744 = vpop.permute.xlu0 %743
  %v745 = vsel %vm197, %v740, %v742
  %v746 = vsel %vm197, %v742, %v744
  %v747 = vsel %vm197, %v744, %v738
  %v753 = vsel %vm204, %v738, %v740
  %v755 = vmul.bf16 %v753, %v212
  %v756 = vmul.bf16 %v745, %v216
  %v757 = vmul.bf16 %v746, %v220
  %v758 = vmul.bf16 %v747, %v224
  %759 = vrot.lane.b32.xlu0 %v688, 1
  %v760 = vpop.permute.xlu0 %759
  %761 = vrot.lane.b32.xlu0 %v685, 1
  %v762 = vpop.permute.xlu0 %761
  %763 = vrot.lane.b32.xlu0 %v686, 1
  %v764 = vpop.permute.xlu0 %763
  %765 = vrot.lane.b32.xlu0 %v687, 1
  %v766 = vpop.permute.xlu0 %765
  %v767 = vsel %vm237, %v762, %v764
  %v768 = vsel %vm237, %v764, %v766
  %v769 = vsel %vm237, %v766, %v760
  %v775 = vsel %vm244, %v760, %v762
  %v777 = vmul.bf16 %v775, %v252
  %v778 = vmul.bf16 %v767, %v256
  %v779 = vmul.bf16 %v768, %v260
  %v780 = vmul.bf16 %v769, %v264
  %v781 = vmul.bf16 %v685, %v272
  %v782 = vmul.bf16 %v686, %v276
  %v783 = vmul.bf16 %v687, %v280
  %v784 = vmul.bf16 %v688, %v284
  %785 = vrot.lane.b32.xlu0 %v685, 127
  %v786 = vpop.permute.xlu0 %785
  %787 = vrot.lane.b32.xlu0 %v686, 127
  %v788 = vpop.permute.xlu0 %787
  %789 = vrot.lane.b32.xlu0 %v687, 127
  %v790 = vpop.permute.xlu0 %789
  %791 = vrot.lane.b32.xlu0 %v688, 127
  %v792 = vpop.permute.xlu0 %791
  %v793 = vsel %vm297, %v786, %v788
  %v794 = vsel %vm297, %v788, %v790
  %v795 = vsel %vm297, %v790, %v792
  %v801 = vsel %vm304, %v792, %v786
  %v803 = vmul.bf16 %v793, %v312
  %v804 = vmul.bf16 %v794, %v316
  %v805 = vmul.bf16 %v795, %v320
  %v806 = vmul.bf16 %v801, %v324
  %807 = vrot.lane.b32.xlu0 %v685, 113
  %v808 = vpop.permute.xlu0 %807
  %809 = vrot.lane.b32.xlu0 %v686, 113
  %v810 = vpop.permute.xlu0 %809
  %811 = vrot.lane.b32.xlu0 %v687, 113
  %v812 = vpop.permute.xlu0 %811
  %813 = vrot.lane.b32.xlu0 %v688, 113
  %v814 = vpop.permute.xlu0 %813
  %v815 = vsel %vm337, %v808, %v810
  %v816 = vsel %vm337, %v810, %v812
  %v817 = vsel %vm337, %v812, %v814
  %v823 = vsel %vm344, %v814, %v808
  %v825 = vmul.bf16 %v815, %v352
  %v826 = vmul.bf16 %v816, %v356
  %v827 = vmul.bf16 %v817, %v360
  %v828 = vmul.bf16 %v823, %v364
  %829 = vrot.lane.b32.xlu0 %v685, 112
  %v830 = vpop.permute.xlu0 %829
  %831 = vrot.lane.b32.xlu0 %v686, 112
  %v832 = vpop.permute.xlu0 %831
  %833 = vrot.lane.b32.xlu0 %v687, 112
  %v834 = vpop.permute.xlu0 %833
  %835 = vrot.lane.b32.xlu0 %v688, 112
  %v836 = vpop.permute.xlu0 %835
  %v837 = vsel %vm377, %v830, %v832
  %v838 = vsel %vm377, %v832, %v834
  %v839 = vsel %vm377, %v834, %v836
  %v845 = vsel %vm384, %v836, %v830
  %v847 = vmul.bf16 %v837, %v392
  %v848 = vmul.bf16 %v838, %v396
  %v849 = vmul.bf16 %v839, %v400
  %v850 = vmul.bf16 %v845, %v404
  %851 = vrot.lane.b32.xlu0 %v685, 111
  %v852 = vpop.permute.xlu0 %851
  %853 = vrot.lane.b32.xlu0 %v686, 111
  %v854 = vpop.permute.xlu0 %853
  %855 = vrot.lane.b32.xlu0 %v687, 111
  %v856 = vpop.permute.xlu0 %855
  %857 = vrot.lane.b32.xlu0 %v688, 111
  %v858 = vpop.permute.xlu0 %857
  %v859 = vsel %vm417, %v852, %v854
  %v860 = vsel %vm417, %v854, %v856
  %v861 = vsel %vm417, %v856, %v858
  %v867 = vsel %vm424, %v858, %v852
  %v869 = vmul.bf16 %v859, %v432
  %v870 = vmul.bf16 %v860, %v436
  %v871 = vmul.bf16 %v861, %v440
  %v872 = vmul.bf16 %v867, %v444
  %v877 = vrot.slane %v733, 4
  %v878 = vrot.slane %v734, 4
  %v879 = vrot.slane %v735, 4
  %v880 = vrot.slane %v736, 4
  %v885 = vrot.slane %v777, 4
  %v886 = vrot.slane %v778, 4
  %v887 = vrot.slane %v779, 4
  %v888 = vrot.slane %v780, 4
  %v893 = vrot.slane %v803, 4
  %v894 = vrot.slane %v804, 4
  %v895 = vrot.slane %v805, 4
  %v896 = vrot.slane %v806, 4
  %v901 = vrot.slane %v847, 4
  %v902 = vrot.slane %v848, 4
  %v903 = vrot.slane %v849, 4
  %v904 = vrot.slane %v850, 4
  %v907 = vsel %vm536, %v711, %v877
  %v911 = vsel %vm536, %v712, %v878
  %v915 = vsel %vm536, %v713, %v879
  %v919 = vsel %vm536, %v714, %v880
  %v923 = vsel %vm536, %v755, %v885
  %v927 = vsel %vm536, %v756, %v886
  %v931 = vsel %vm536, %v757, %v887
  %v935 = vsel %vm536, %v758, %v888
  %v939 = vsel %vm536, %v781, %v893
  %v943 = vsel %vm536, %v782, %v894
  %v947 = vsel %vm536, %v783, %v895
  %v951 = vsel %vm536, %v784, %v896
  %v955 = vsel %vm536, %v825, %v901
  %v959 = vsel %vm536, %v826, %v902
  %v963 = vsel %vm536, %v827, %v903
  %v967 = vsel %vm536, %v828, %v904
  %v969 = vld [vmem:[%s4] sm:$0xf]
  %v970 = vld [vmem:[%s5] sm:$0xff]
  %972 = vset.pattern.permute.xlu0 0
  %973 = vperm.xlu0 %972, %v970
  %v974 = vpop.permute.xlu0 %973
  %vm976 = vcmask 588800
  %v978 = vsel %vm976, %v969, 0
  %v981 = vsel %vm536, %v869, 0
  %v984 = vsel %vm536, %v870, 0
  %v987 = vsel %vm536, %v871, 0
  %v990 = vsel %vm536, %v872, 0
  %992 = vmatprep.subr.bf16.mxu0 %v911
  %993 = vmatpush1.bf16.msra.mxu0 %v907
  %994 = vmatprep.subr.bf16.mxu0 %v927
  %995 = vmatpush1.bf16.msra.mxu0 %v923
  %996 = vmatprep.subr.bf16.mxu0 %v943
  %997 = vmatpush1.bf16.msra.mxu0 %v939
  %998 = vmatprep.subr.bf16.mxu0 %v959
  %999 = vmatpush1.bf16.msra.mxu0 %v955
  %1000 = vmatprep.subr.bf16.mxu0 %v984
  %1001 = vmatpush1.bf16.msra.mxu0 %v981
  %1002 = vmatprep.subr.bf16.mxu0 0
  %1003 = vmatpush1.bf16.msra.mxu0 0
  %1004 = vmatprep.subr.bf16.mxu0 0
  %1005 = vmatpush1.bf16.msra.mxu0 0
  %1006 = vmatprep.subr.bf16.mxu0 0
  %1007 = vmatpush1.bf16.msra.mxu0 0
  %1008 = vmatprep.subr.bf16.mxu0 0
  %1009 = vmatpush1.bf16.msra.mxu0 0
  %1010 = vmatprep.subr.bf16.mxu0 0
  %1011 = vmatpush1.bf16.msra.mxu0 0
  %1012 = vmatprep.subr.bf16.mxu0 0
  %1013 = vmatpush1.bf16.msra.mxu0 0
  %1014 = vmatprep.subr.bf16.mxu0 0
  %1015 = vmatpush1.bf16.msra.mxu0 0
  %1016 = vmatprep.subr.bf16.mxu0 0
  %1017 = vmatpush1.bf16.msra.mxu0 0
  %1018 = vmatprep.subr.bf16.mxu0 0
  %1019 = vmatpush1.bf16.msra.mxu0 0
  %1020 = vmatprep.subr.bf16.mxu0 0
  %1021 = vmatpush1.bf16.msra.mxu0 0
  %1022 = vmatprep.subr.bf16.mxu0 0
  %1023 = vmatpush1.bf16.msra.mxu0 0
  %1024 = vmatprep.mubr.bf16.mxu0 0
  %1025 = vmatmul.mubr.bf16.gmra.mrb[0].mxu0 %v978
  %v1026 = vpop.f32.mrb[0].mxu0
  %v1027 = vadd.f32 %v974, %v1026
  %v1028 = vpop.f32.mrb[0].mxu0
  %v1029 = vadd.f32 %v974, %v1028
  %v1030 = vpop.f32.mrb[0].mxu0
  %v1031 = vpop.f32.mrb[0].mxu0
  %1032 = vdwg.mxu0
  %1033 = vmatprep.subr.bf16.mxu0 %v919
  %1034 = vmatpush1.bf16.msra.mxu0 %v915
  %1035 = vmatprep.subr.bf16.mxu0 %v935
  %1036 = vmatpush1.bf16.msra.mxu0 %v931
  %1037 = vmatprep.subr.bf16.mxu0 %v951
  %1038 = vmatpush1.bf16.msra.mxu0 %v947
  %1039 = vmatprep.subr.bf16.mxu0 %v967
  %1040 = vmatpush1.bf16.msra.mxu0 %v963
  %1041 = vmatprep.subr.bf16.mxu0 %v990
  %1042 = vmatpush1.bf16.msra.mxu0 %v987
  %1043 = vmatprep.subr.bf16.mxu0 0
  %1044 = vmatpush1.bf16.msra.mxu0 0
  %1045 = vmatprep.subr.bf16.mxu0 0
  %1046 = vmatpush1.bf16.msra.mxu0 0
  %1047 = vmatprep.subr.bf16.mxu0 0
  %1048 = vmatpush1.bf16.msra.mxu0 0
  %1049 = vmatprep.subr.bf16.mxu0 0
  %1050 = vmatpush1.bf16.msra.mxu0 0
  %1051 = vmatprep.subr.bf16.mxu0 0
  %1052 = vmatpush1.bf16.msra.mxu0 0
  %1053 = vmatprep.subr.bf16.mxu0 0
  %1054 = vmatpush1.bf16.msra.mxu0 0
  %1055 = vmatprep.subr.bf16.mxu0 0
  %1056 = vmatpush1.bf16.msra.mxu0 0
  %1057 = vmatprep.subr.bf16.mxu0 0
  %1058 = vmatpush1.bf16.msra.mxu0 0
  %1059 = vmatprep.subr.bf16.mxu0 0
  %1060 = vmatpush1.bf16.msra.mxu0 0
  %1061 = vmatprep.subr.bf16.mxu0 0
  %1062 = vmatpush1.bf16.msra.mxu0 0
  %1063 = vmatprep.subr.bf16.mxu0 0
  %1064 = vmatpush1.bf16.msra.mxu0 0
  %1065 = vmatprep.mubr.bf16.mxu0 0
  %1066 = vmatmul.mubr.bf16.gmra.mrb[0].mxu0 %v978
  %v1067 = vpop.f32.mrb[0].mxu0
  %v1068 = vadd.f32 %v974, %v1067
  %v1069 = vpop.f32.mrb[0].mxu0
  %v1070 = vadd.f32 %v974, %v1069
  %v1071 = vpop.f32.mrb[0].mxu0
  %v1072 = vpop.f32.mrb[0].mxu0
  %1073 = vdwg.mxu0
  %v1074 = vmax.f32 %v1027, 0.0
  %v1075 = vmax.f32 %v1029, 0.0
  %v1076 = vmax.f32 %v1068, 0.0
  %v1077 = vmax.f32 %v1070, 0.0
  %v1078 = vpack.c.bf16 %v1074, %v1074
  %v1079 = vpack.c.bf16 %v1075, %v1075
  %v1080 = vpack.c.bf16 %v1076, %v1076
  %v1081 = vpack.c.bf16 %v1077, %v1077
  %1083 = vrot.lane.b32.xlu0 %v1081, 17
  %v1084 = vpop.permute.xlu0 %1083
  %1088 = vrot.lane.b32.xlu0 %v1078, 17
  %v1089 = vpop.permute.xlu0 %1088
  %1090 = vrot.lane.b32.xlu0 %v1079, 17
  %v1091 = vpop.permute.xlu0 %1090
  %1092 = vrot.lane.b32.xlu0 %v1080, 17
  %v1093 = vpop.permute.xlu0 %1092
  %v1094 = vsel %vm93, %v1089, %v1091
  %v1095 = vsel %vm93, %v1091, %v1093
  %v1096 = vsel %vm93, %v1093, %v1084
  %v1102 = vsel %vm100, %v1084, %v1089
  %v1104 = vmul.bf16 %v1102, %v111
  %v1105 = vmul.bf16 %v1094, %v118
  %v1106 = vmul.bf16 %v1095, %v125
  %v1107 = vmul.bf16 %v1096, %v132
  %1108 = vrot.lane.b32.xlu0 %v1081, 16
  %v1109 = vpop.permute.xlu0 %1108
  %1110 = vrot.lane.b32.xlu0 %v1078, 16
  %v1111 = vpop.permute.xlu0 %1110
  %1112 = vrot.lane.b32.xlu0 %v1079, 16
  %v1113 = vpop.permute.xlu0 %1112
  %1114 = vrot.lane.b32.xlu0 %v1080, 16
  %v1115 = vpop.permute.xlu0 %1114
  %v1116 = vsel %vm145, %v1111, %v1113
  %v1117 = vsel %vm145, %v1113, %v1115
  %v1118 = vsel %vm145, %v1115, %v1109
  %v1124 = vsel %vm152, %v1109, %v1111
  %v1126 = vmul.bf16 %v1124, %v163
  %v1127 = vmul.bf16 %v1116, %v170
  %v1128 = vmul.bf16 %v1117, %v177
  %v1129 = vmul.bf16 %v1118, %v184
  %1130 = vrot.lane.b32.xlu0 %v1081, 15
  %v1131 = vpop.permute.xlu0 %1130
  %1132 = vrot.lane.b32.xlu0 %v1078, 15
  %v1133 = vpop.permute.xlu0 %1132
  %1134 = vrot.lane.b32.xlu0 %v1079, 15
  %v1135 = vpop.permute.xlu0 %1134
  %1136 = vrot.lane.b32.xlu0 %v1080, 15
  %v1137 = vpop.permute.xlu0 %1136
  %v1138 = vsel %vm197, %v1133, %v1135
  %v1139 = vsel %vm197, %v1135, %v1137
  %v1140 = vsel %vm197, %v1137, %v1131
  %v1146 = vsel %vm204, %v1131, %v1133
  %v1148 = vmul.bf16 %v1146, %v212
  %v1149 = vmul.bf16 %v1138, %v216
  %v1150 = vmul.bf16 %v1139, %v220
  %v1151 = vmul.bf16 %v1140, %v224
  %1152 = vrot.lane.b32.xlu0 %v1081, 1
  %v1153 = vpop.permute.xlu0 %1152
  %1154 = vrot.lane.b32.xlu0 %v1078, 1
  %v1155 = vpop.permute.xlu0 %1154
  %1156 = vrot.lane.b32.xlu0 %v1079, 1
  %v1157 = vpop.permute.xlu0 %1156
  %1158 = vrot.lane.b32.xlu0 %v1080, 1
  %v1159 = vpop.permute.xlu0 %1158
  %v1160 = vsel %vm237, %v1155, %v1157
  %v1161 = vsel %vm237, %v1157, %v1159
  %v1162 = vsel %vm237, %v1159, %v1153
  %v1168 = vsel %vm244, %v1153, %v1155
  %v1170 = vmul.bf16 %v1168, %v252
  %v1171 = vmul.bf16 %v1160, %v256
  %v1172 = vmul.bf16 %v1161, %v260
  %v1173 = vmul.bf16 %v1162, %v264
  %v1174 = vmul.bf16 %v1078, %v272
  %v1175 = vmul.bf16 %v1079, %v276
  %v1176 = vmul.bf16 %v1080, %v280
  %v1177 = vmul.bf16 %v1081, %v284
  %1178 = vrot.lane.b32.xlu0 %v1078, 127
  %v1179 = vpop.permute.xlu0 %1178
  %1180 = vrot.lane.b32.xlu0 %v1079, 127
  %v1181 = vpop.permute.xlu0 %1180
  %1182 = vrot.lane.b32.xlu0 %v1080, 127
  %v1183 = vpop.permute.xlu0 %1182
  %1184 = vrot.lane.b32.xlu0 %v1081, 127
  %v1185 = vpop.permute.xlu0 %1184
  %v1186 = vsel %vm297, %v1179, %v1181
  %v1187 = vsel %vm297, %v1181, %v1183
  %v1188 = vsel %vm297, %v1183, %v1185
  %v1194 = vsel %vm304, %v1185, %v1179
  %v1196 = vmul.bf16 %v1186, %v312
  %v1197 = vmul.bf16 %v1187, %v316
  %v1198 = vmul.bf16 %v1188, %v320
  %v1199 = vmul.bf16 %v1194, %v324
  %1200 = vrot.lane.b32.xlu0 %v1078, 113
  %v1201 = vpop.permute.xlu0 %1200
  %1202 = vrot.lane.b32.xlu0 %v1079, 113
  %v1203 = vpop.permute.xlu0 %1202
  %1204 = vrot.lane.b32.xlu0 %v1080, 113
  %v1205 = vpop.permute.xlu0 %1204
  %1206 = vrot.lane.b32.xlu0 %v1081, 113
  %v1207 = vpop.permute.xlu0 %1206
  %v1208 = vsel %vm337, %v1201, %v1203
  %v1209 = vsel %vm337, %v1203, %v1205
  %v1210 = vsel %vm337, %v1205, %v1207
  %v1216 = vsel %vm344, %v1207, %v1201
  %v1218 = vmul.bf16 %v1208, %v352
  %v1219 = vmul.bf16 %v1209, %v356
  %v1220 = vmul.bf16 %v1210, %v360
  %v1221 = vmul.bf16 %v1216, %v364
  %1222 = vrot.lane.b32.xlu0 %v1078, 112
  %v1223 = vpop.permute.xlu0 %1222
  %1224 = vrot.lane.b32.xlu0 %v1079, 112
  %v1225 = vpop.permute.xlu0 %1224
  %1226 = vrot.lane.b32.xlu0 %v1080, 112
  %v1227 = vpop.permute.xlu0 %1226
  %1228 = vrot.lane.b32.xlu0 %v1081, 112
  %v1229 = vpop.permute.xlu0 %1228
  %v1230 = vsel %vm377, %v1223, %v1225
  %v1231 = vsel %vm377, %v1225, %v1227
  %v1232 = vsel %vm377, %v1227, %v1229
  %v1238 = vsel %vm384, %v1229, %v1223
  %v1240 = vmul.bf16 %v1230, %v392
  %v1241 = vmul.bf16 %v1231, %v396
  %v1242 = vmul.bf16 %v1232, %v400
  %v1243 = vmul.bf16 %v1238, %v404
  %1244 = vrot.lane.b32.xlu0 %v1078, 111
  %v1245 = vpop.permute.xlu0 %1244
  %1246 = vrot.lane.b32.xlu0 %v1079, 111
  %v1247 = vpop.permute.xlu0 %1246
  %1248 = vrot.lane.b32.xlu0 %v1080, 111
  %v1249 = vpop.permute.xlu0 %1248
  %1250 = vrot.lane.b32.xlu0 %v1081, 111
  %v1251 = vpop.permute.xlu0 %1250
  %v1252 = vsel %vm417, %v1245, %v1247
  %v1253 = vsel %vm417, %v1247, %v1249
  %v1254 = vsel %vm417, %v1249, %v1251
  %v1260 = vsel %vm424, %v1251, %v1245
  %v1262 = vmul.bf16 %v1252, %v432
  %v1263 = vmul.bf16 %v1253, %v436
  %v1264 = vmul.bf16 %v1254, %v440
  %v1265 = vmul.bf16 %v1260, %v444
  %v1270 = vrot.slane %v1126, 4
  %v1271 = vrot.slane %v1127, 4
  %v1272 = vrot.slane %v1128, 4
  %v1273 = vrot.slane %v1129, 4
  %v1278 = vrot.slane %v1170, 4
  %v1279 = vrot.slane %v1171, 4
  %v1280 = vrot.slane %v1172, 4
  %v1281 = vrot.slane %v1173, 4
  %v1286 = vrot.slane %v1196, 4
  %v1287 = vrot.slane %v1197, 4
  %v1288 = vrot.slane %v1198, 4
  %v1289 = vrot.slane %v1199, 4
  %v1294 = vrot.slane %v1240, 4
  %v1295 = vrot.slane %v1241, 4
  %v1296 = vrot.slane %v1242, 4
  %v1297 = vrot.slane %v1243, 4
  %v1300 = vsel %vm536, %v1104, %v1270
  %v1304 = vsel %vm536, %v1105, %v1271
  %v1308 = vsel %vm536, %v1106, %v1272
  %v1312 = vsel %vm536, %v1107, %v1273
  %v1316 = vsel %vm536, %v1148, %v1278
  %v1320 = vsel %vm536, %v1149, %v1279
  %v1324 = vsel %vm536, %v1150, %v1280
  %v1328 = vsel %vm536, %v1151, %v1281
  %v1332 = vsel %vm536, %v1174, %v1286
  %v1336 = vsel %vm536, %v1175, %v1287
  %v1340 = vsel %vm536, %v1176, %v1288
  %v1344 = vsel %vm536, %v1177, %v1289
  %v1348 = vsel %vm536, %v1218, %v1294
  %v1352 = vsel %vm536, %v1219, %v1295
  %v1356 = vsel %vm536, %v1220, %v1296
  %v1360 = vsel %vm536, %v1221, %v1297
  %v1362 = vld [vmem:[%s6] sm:$0xf]
  %v1363 = vld [vmem:[%s7] sm:$0xff]
  %1365 = vset.pattern.permute.xlu0 0
  %1366 = vperm.xlu0 %1365, %v1363
  %v1367 = vpop.permute.xlu0 %1366
  %v1370 = vsel %vm976, %v1362, 0
  %v1373 = vsel %vm536, %v1262, 0
  %v1376 = vsel %vm536, %v1263, 0
  %v1379 = vsel %vm536, %v1264, 0
  %v1382 = vsel %vm536, %v1265, 0
  %1384 = vmatprep.subr.bf16.mxu0 %v1304
  %1385 = vmatpush1.bf16.msra.mxu0 %v1300
  %1386 = vmatprep.subr.bf16.mxu0 %v1320
  %1387 = vmatpush1.bf16.msra.mxu0 %v1316
  %1388 = vmatprep.subr.bf16.mxu0 %v1336
  %1389 = vmatpush1.bf16.msra.mxu0 %v1332
  %1390 = vmatprep.subr.bf16.mxu0 %v1352
  %1391 = vmatpush1.bf16.msra.mxu0 %v1348
  %1392 = vmatprep.subr.bf16.mxu0 %v1376
  %1393 = vmatpush1.bf16.msra.mxu0 %v1373
  %1394 = vmatprep.subr.bf16.mxu0 0
  %1395 = vmatpush1.bf16.msra.mxu0 0
  %1396 = vmatprep.subr.bf16.mxu0 0
  %1397 = vmatpush1.bf16.msra.mxu0 0
  %1398 = vmatprep.subr.bf16.mxu0 0
  %1399 = vmatpush1.bf16.msra.mxu0 0
  %1400 = vmatprep.subr.bf16.mxu0 0
  %1401 = vmatpush1.bf16.msra.mxu0 0
  %1402 = vmatprep.subr.bf16.mxu0 0
  %1403 = vmatpush1.bf16.msra.mxu0 0
  %1404 = vmatprep.subr.bf16.mxu0 0
  %1405 = vmatpush1.bf16.msra.mxu0 0
  %1406 = vmatprep.subr.bf16.mxu0 0
  %1407 = vmatpush1.bf16.msra.mxu0 0
  %1408 = vmatprep.subr.bf16.mxu0 0
  %1409 = vmatpush1.bf16.msra.mxu0 0
  %1410 = vmatprep.subr.bf16.mxu0 0
  %1411 = vmatpush1.bf16.msra.mxu0 0
  %1412 = vmatprep.subr.bf16.mxu0 0
  %1413 = vmatpush1.bf16.msra.mxu0 0
  %1414 = vmatprep.subr.bf16.mxu0 0
  %1415 = vmatpush1.bf16.msra.mxu0 0
  %1416 = vmatprep.mubr.bf16.mxu0 0
  %1417 = vmatmul.mubr.bf16.gmra.mrb[0].mxu0 %v1370
  %v1418 = vpop.f32.mrb[0].mxu0
  %v1419 = vadd.f32 %v1367, %v1418
  %v1420 = vpop.f32.mrb[0].mxu0
  %v1421 = vadd.f32 %v1367, %v1420
  %v1422 = vpop.f32.mrb[0].mxu0
  %v1423 = vpop.f32.mrb[0].mxu0
  %1424 = vdwg.mxu0
  %1425 = vmatprep.subr.bf16.mxu0 %v1312
  %1426 = vmatpush1.bf16.msra.mxu0 %v1308
  %1427 = vmatprep.subr.bf16.mxu0 %v1328
  %1428 = vmatpush1.bf16.msra.mxu0 %v1324
  %1429 = vmatprep.subr.bf16.mxu0 %v1344
  %1430 = vmatpush1.bf16.msra.mxu0 %v1340
  %1431 = vmatprep.subr.bf16.mxu0 %v1360
  %1432 = vmatpush1.bf16.msra.mxu0 %v1356
  %1433 = vmatprep.subr.bf16.mxu0 %v1382
  %1434 = vmatpush1.bf16.msra.mxu0 %v1379
  %1435 = vmatprep.subr.bf16.mxu0 0
  %1436 = vmatpush1.bf16.msra.mxu0 0
  %1437 = vmatprep.subr.bf16.mxu0 0
  %1438 = vmatpush1.bf16.msra.mxu0 0
  %1439 = vmatprep.subr.bf16.mxu0 0
  %1440 = vmatpush1.bf16.msra.mxu0 0
  %1441 = vmatprep.subr.bf16.mxu0 0
  %1442 = vmatpush1.bf16.msra.mxu0 0
  %1443 = vmatprep.subr.bf16.mxu0 0
  %1444 = vmatpush1.bf16.msra.mxu0 0
  %1445 = vmatprep.subr.bf16.mxu0 0
  %1446 = vmatpush1.bf16.msra.mxu0 0
  %1447 = vmatprep.subr.bf16.mxu0 0
  %1448 = vmatpush1.bf16.msra.mxu0 0
  %1449 = vmatprep.subr.bf16.mxu0 0
  %1450 = vmatpush1.bf16.msra.mxu0 0
  %1451 = vmatprep.subr.bf16.mxu0 0
  %1452 = vmatpush1.bf16.msra.mxu0 0
  %1453 = vmatprep.subr.bf16.mxu0 0
  %1454 = vmatpush1.bf16.msra.mxu0 0
  %1455 = vmatprep.subr.bf16.mxu0 0
  %1456 = vmatpush1.bf16.msra.mxu0 0
  %1457 = vmatprep.mubr.bf16.mxu0 0
  %1458 = vmatmul.mubr.bf16.gmra.mrb[0].mxu0 %v1370
  %v1459 = vpop.f32.mrb[0].mxu0
  %v1460 = vadd.f32 %v1367, %v1459
  %v1461 = vpop.f32.mrb[0].mxu0
  %v1462 = vadd.f32 %v1367, %v1461
  %v1463 = vpop.f32.mrb[0].mxu0
  %v1464 = vpop.f32.mrb[0].mxu0
  %1465 = vdwg.mxu0
  %v1466 = vmax.f32 %v1419, 0.0
  %v1467 = vmax.f32 %v1421, 0.0
  %v1468 = vmax.f32 %v1460, 0.0
  %v1469 = vmax.f32 %v1462, 0.0
  %v1470 = vpack.c.bf16 %v1466, %v1466
  %v1471 = vpack.c.bf16 %v1467, %v1467
  %v1472 = vpack.c.bf16 %v1468, %v1468
  %v1473 = vpack.c.bf16 %v1469, %v1469
  %1475 = vrot.lane.b32.xlu0 %v1473, 17
  %v1476 = vpop.permute.xlu0 %1475
  %1480 = vrot.lane.b32.xlu0 %v1470, 17
  %v1481 = vpop.permute.xlu0 %1480
  %1482 = vrot.lane.b32.xlu0 %v1471, 17
  %v1483 = vpop.permute.xlu0 %1482
  %1484 = vrot.lane.b32.xlu0 %v1472, 17
  %v1485 = vpop.permute.xlu0 %1484
  %v1486 = vsel %vm93, %v1481, %v1483
  %v1487 = vsel %vm93, %v1483, %v1485
  %v1488 = vsel %vm93, %v1485, %v1476
  %v1494 = vsel %vm100, %v1476, %v1481
  %v1496 = vmul.bf16 %v1494, %v111
  %v1497 = vmul.bf16 %v1486, %v118
  %v1498 = vmul.bf16 %v1487, %v125
  %v1499 = vmul.bf16 %v1488, %v132
  %1500 = vrot.lane.b32.xlu0 %v1473, 16
  %v1501 = vpop.permute.xlu0 %1500
  %1502 = vrot.lane.b32.xlu0 %v1470, 16
  %v1503 = vpop.permute.xlu0 %1502
  %1504 = vrot.lane.b32.xlu0 %v1471, 16
  %v1505 = vpop.permute.xlu0 %1504
  %1506 = vrot.lane.b32.xlu0 %v1472, 16
  %v1507 = vpop.permute.xlu0 %1506
  %v1508 = vsel %vm145, %v1503, %v1505
  %v1509 = vsel %vm145, %v1505, %v1507
  %v1510 = vsel %vm145, %v1507, %v1501
  %v1516 = vsel %vm152, %v1501, %v1503
  %v1518 = vmul.bf16 %v1516, %v163
  %v1519 = vmul.bf16 %v1508, %v170
  %v1520 = vmul.bf16 %v1509, %v177
  %v1521 = vmul.bf16 %v1510, %v184
  %1522 = vrot.lane.b32.xlu0 %v1473, 15
  %v1523 = vpop.permute.xlu0 %1522
  %1524 = vrot.lane.b32.xlu0 %v1470, 15
  %v1525 = vpop.permute.xlu0 %1524
  %1526 = vrot.lane.b32.xlu0 %v1471, 15
  %v1527 = vpop.permute.xlu0 %1526
  %1528 = vrot.lane.b32.xlu0 %v1472, 15
  %v1529 = vpop.permute.xlu0 %1528
  %v1530 = vsel %vm197, %v1525, %v1527
  %v1531 = vsel %vm197, %v1527, %v1529
  %v1532 = vsel %vm197, %v1529, %v1523
  %v1538 = vsel %vm204, %v1523, %v1525
  %v1540 = vmul.bf16 %v1538, %v212
  %v1541 = vmul.bf16 %v1530, %v216
  %v1542 = vmul.bf16 %v1531, %v220
  %v1543 = vmul.bf16 %v1532, %v224
  %1544 = vrot.lane.b32.xlu0 %v1473, 1
  %v1545 = vpop.permute.xlu0 %1544
  %1546 = vrot.lane.b32.xlu0 %v1470, 1
  %v1547 = vpop.permute.xlu0 %1546
  %1548 = vrot.lane.b32.xlu0 %v1471, 1
  %v1549 = vpop.permute.xlu0 %1548
  %1550 = vrot.lane.b32.xlu0 %v1472, 1
  %v1551 = vpop.permute.xlu0 %1550
  %v1552 = vsel %vm237, %v1547, %v1549
  %v1553 = vsel %vm237, %v1549, %v1551
  %v1554 = vsel %vm237, %v1551, %v1545
  %v1560 = vsel %vm244, %v1545, %v1547
  %v1562 = vmul.bf16 %v1560, %v252
  %v1563 = vmul.bf16 %v1552, %v256
  %v1564 = vmul.bf16 %v1553, %v260
  %v1565 = vmul.bf16 %v1554, %v264
  %v1566 = vmul.bf16 %v1470, %v272
  %v1567 = vmul.bf16 %v1471, %v276
  %v1568 = vmul.bf16 %v1472, %v280
  %v1569 = vmul.bf16 %v1473, %v284
  %1570 = vrot.lane.b32.xlu0 %v1470, 127
  %v1571 = vpop.permute.xlu0 %1570
  %1572 = vrot.lane.b32.xlu0 %v1471, 127
  %v1573 = vpop.permute.xlu0 %1572
  %1574 = vrot.lane.b32.xlu0 %v1472, 127
  %v1575 = vpop.permute.xlu0 %1574
  %1576 = vrot.lane.b32.xlu0 %v1473, 127
  %v1577 = vpop.permute.xlu0 %1576
  %v1578 = vsel %vm297, %v1571, %v1573
  %v1579 = vsel %vm297, %v1573, %v1575
  %v1580 = vsel %vm297, %v1575, %v1577
  %v1586 = vsel %vm304, %v1577, %v1571
  %v1588 = vmul.bf16 %v1578, %v312
  %v1589 = vmul.bf16 %v1579, %v316
  %v1590 = vmul.bf16 %v1580, %v320
  %v1591 = vmul.bf16 %v1586, %v324
  %1592 = vrot.lane.b32.xlu0 %v1470, 113
  %v1593 = vpop.permute.xlu0 %1592
  %1594 = vrot.lane.b32.xlu0 %v1471, 113
  %v1595 = vpop.permute.xlu0 %1594
  %1596 = vrot.lane.b32.xlu0 %v1472, 113
  %v1597 = vpop.permute.xlu0 %1596
  %1598 = vrot.lane.b32.xlu0 %v1473, 113
  %v1599 = vpop.permute.xlu0 %1598
  %v1600 = vsel %vm337, %v1593, %v1595
  %v1601 = vsel %vm337, %v1595, %v1597
  %v1602 = vsel %vm337, %v1597, %v1599
  %v1608 = vsel %vm344, %v1599, %v1593
  %v1610 = vmul.bf16 %v1600, %v352
  %v1611 = vmul.bf16 %v1601, %v356
  %v1612 = vmul.bf16 %v1602, %v360
  %v1613 = vmul.bf16 %v1608, %v364
  %1614 = vrot.lane.b32.xlu0 %v1470, 112
  %v1615 = vpop.permute.xlu0 %1614
  %1616 = vrot.lane.b32.xlu0 %v1471, 112
  %v1617 = vpop.permute.xlu0 %1616
  %1618 = vrot.lane.b32.xlu0 %v1472, 112
  %v1619 = vpop.permute.xlu0 %1618
  %1620 = vrot.lane.b32.xlu0 %v1473, 112
  %v1621 = vpop.permute.xlu0 %1620
  %v1622 = vsel %vm377, %v1615, %v1617
  %v1623 = vsel %vm377, %v1617, %v1619
  %v1624 = vsel %vm377, %v1619, %v1621
  %v1630 = vsel %vm384, %v1621, %v1615
  %v1632 = vmul.bf16 %v1622, %v392
  %v1633 = vmul.bf16 %v1623, %v396
  %v1634 = vmul.bf16 %v1624, %v400
  %v1635 = vmul.bf16 %v1630, %v404
  %1636 = vrot.lane.b32.xlu0 %v1470, 111
  %v1637 = vpop.permute.xlu0 %1636
  %1638 = vrot.lane.b32.xlu0 %v1471, 111
  %v1639 = vpop.permute.xlu0 %1638
  %1640 = vrot.lane.b32.xlu0 %v1472, 111
  %v1641 = vpop.permute.xlu0 %1640
  %1642 = vrot.lane.b32.xlu0 %v1473, 111
  %v1643 = vpop.permute.xlu0 %1642
  %v1644 = vsel %vm417, %v1637, %v1639
  %v1645 = vsel %vm417, %v1639, %v1641
  %v1646 = vsel %vm417, %v1641, %v1643
  %v1652 = vsel %vm424, %v1643, %v1637
  %v1654 = vmul.bf16 %v1644, %v432
  %v1655 = vmul.bf16 %v1645, %v436
  %v1656 = vmul.bf16 %v1646, %v440
  %v1657 = vmul.bf16 %v1652, %v444
  %v1662 = vrot.slane %v1518, 4
  %v1663 = vrot.slane %v1519, 4
  %v1664 = vrot.slane %v1520, 4
  %v1665 = vrot.slane %v1521, 4
  %v1670 = vrot.slane %v1562, 4
  %v1671 = vrot.slane %v1563, 4
  %v1672 = vrot.slane %v1564, 4
  %v1673 = vrot.slane %v1565, 4
  %v1678 = vrot.slane %v1588, 4
  %v1679 = vrot.slane %v1589, 4
  %v1680 = vrot.slane %v1590, 4
  %v1681 = vrot.slane %v1591, 4
  %v1686 = vrot.slane %v1632, 4
  %v1687 = vrot.slane %v1633, 4
  %v1688 = vrot.slane %v1634, 4
  %v1689 = vrot.slane %v1635, 4
  %v1692 = vsel %vm536, %v1496, %v1662
  %v1696 = vsel %vm536, %v1497, %v1663
  %v1700 = vsel %vm536, %v1498, %v1664
  %v1704 = vsel %vm536, %v1499, %v1665
  %v1708 = vsel %vm536, %v1540, %v1670
  %v1712 = vsel %vm536, %v1541, %v1671
  %v1716 = vsel %vm536, %v1542, %v1672
  %v1720 = vsel %vm536, %v1543, %v1673
  %v1724 = vsel %vm536, %v1566, %v1678
  %v1728 = vsel %vm536, %v1567, %v1679
  %v1732 = vsel %vm536, %v1568, %v1680
  %v1736 = vsel %vm536, %v1569, %v1681
  %v1740 = vsel %vm536, %v1610, %v1686
  %v1744 = vsel %vm536, %v1611, %v1687
  %v1748 = vsel %vm536, %v1612, %v1688
  %v1752 = vsel %vm536, %v1613, %v1689
  %v1754 = vld [vmem:[%s8] sm:$0xf]
  %v1755 = vld [vmem:[%s9] sm:$0xff]
  %1757 = vset.pattern.permute.xlu0 0
  %1758 = vperm.xlu0 %1757, %v1755
  %v1759 = vpop.permute.xlu0 %1758
  %v1762 = vsel %vm976, %v1754, 0
  %v1765 = vsel %vm536, %v1654, 0
  %v1768 = vsel %vm536, %v1655, 0
  %v1771 = vsel %vm536, %v1656, 0
  %v1774 = vsel %vm536, %v1657, 0
  %1776 = vmatprep.subr.bf16.mxu0 %v1696
  %1777 = vmatpush1.bf16.msra.mxu0 %v1692
  %1778 = vmatprep.subr.bf16.mxu0 %v1712
  %1779 = vmatpush1.bf16.msra.mxu0 %v1708
  %1780 = vmatprep.subr.bf16.mxu0 %v1728
  %1781 = vmatpush1.bf16.msra.mxu0 %v1724
  %1782 = vmatprep.subr.bf16.mxu0 %v1744
  %1783 = vmatpush1.bf16.msra.mxu0 %v1740
  %1784 = vmatprep.subr.bf16.mxu0 %v1768
  %1785 = vmatpush1.bf16.msra.mxu0 %v1765
  %1786 = vmatprep.subr.bf16.mxu0 0
  %1787 = vmatpush1.bf16.msra.mxu0 0
  %1788 = vmatprep.subr.bf16.mxu0 0
  %1789 = vmatpush1.bf16.msra.mxu0 0
  %1790 = vmatprep.subr.bf16.mxu0 0
  %1791 = vmatpush1.bf16.msra.mxu0 0
  %1792 = vmatprep.subr.bf16.mxu0 0
  %1793 = vmatpush1.bf16.msra.mxu0 0
  %1794 = vmatprep.subr.bf16.mxu0 0
  %1795 = vmatpush1.bf16.msra.mxu0 0
  %1796 = vmatprep.subr.bf16.mxu0 0
  %1797 = vmatpush1.bf16.msra.mxu0 0
  %1798 = vmatprep.subr.bf16.mxu0 0
  %1799 = vmatpush1.bf16.msra.mxu0 0
  %1800 = vmatprep.subr.bf16.mxu0 0
  %1801 = vmatpush1.bf16.msra.mxu0 0
  %1802 = vmatprep.subr.bf16.mxu0 0
  %1803 = vmatpush1.bf16.msra.mxu0 0
  %1804 = vmatprep.subr.bf16.mxu0 0
  %1805 = vmatpush1.bf16.msra.mxu0 0
  %1806 = vmatprep.subr.bf16.mxu0 0
  %1807 = vmatpush1.bf16.msra.mxu0 0
  %1808 = vmatprep.mubr.bf16.mxu0 0
  %1809 = vmatmul.mubr.bf16.gmra.mrb[0].mxu0 %v1762
  %v1810 = vpop.f32.mrb[0].mxu0
  %v1811 = vadd.f32 %v1759, %v1810
  %v1812 = vpop.f32.mrb[0].mxu0
  %v1813 = vadd.f32 %v1759, %v1812
  %v1814 = vpop.f32.mrb[0].mxu0
  %v1815 = vpop.f32.mrb[0].mxu0
  %1816 = vdwg.mxu0
  %1817 = vmatprep.subr.bf16.mxu0 %v1704
  %1818 = vmatpush1.bf16.msra.mxu0 %v1700
  %1819 = vmatprep.subr.bf16.mxu0 %v1720
  %1820 = vmatpush1.bf16.msra.mxu0 %v1716
  %1821 = vmatprep.subr.bf16.mxu0 %v1736
  %1822 = vmatpush1.bf16.msra.mxu0 %v1732
  %1823 = vmatprep.subr.bf16.mxu0 %v1752
  %1824 = vmatpush1.bf16.msra.mxu0 %v1748
  %1825 = vmatprep.subr.bf16.mxu0 %v1774
  %1826 = vmatpush1.bf16.msra.mxu0 %v1771
  %1827 = vmatprep.subr.bf16.mxu0 0
  %1828 = vmatpush1.bf16.msra.mxu0 0
  %1829 = vmatprep.subr.bf16.mxu0 0
  %1830 = vmatpush1.bf16.msra.mxu0 0
  %1831 = vmatprep.subr.bf16.mxu0 0
  %1832 = vmatpush1.bf16.msra.mxu0 0
  %1833 = vmatprep.subr.bf16.mxu0 0
  %1834 = vmatpush1.bf16.msra.mxu0 0
  %1835 = vmatprep.subr.bf16.mxu0 0
  %1836 = vmatpush1.bf16.msra.mxu0 0
  %1837 = vmatprep.subr.bf16.mxu0 0
  %1838 = vmatpush1.bf16.msra.mxu0 0
  %1839 = vmatprep.subr.bf16.mxu0 0
  %1840 = vmatpush1.bf16.msra.mxu0 0
  %1841 = vmatprep.subr.bf16.mxu0 0
  %1842 = vmatpush1.bf16.msra.mxu0 0
  %1843 = vmatprep.subr.bf16.mxu0 0
  %1844 = vmatpush1.bf16.msra.mxu0 0
  %1845 = vmatprep.subr.bf16.mxu0 0
  %1846 = vmatpush1.bf16.msra.mxu0 0
  %1847 = vmatprep.subr.bf16.mxu0 0
  %1848 = vmatpush1.bf16.msra.mxu0 0
  %1849 = vmatprep.mubr.bf16.mxu0 0
  %1850 = vmatmul.mubr.bf16.gmra.mrb[0].mxu0 %v1762
  %v1851 = vpop.f32.mrb[0].mxu0
  %v1852 = vadd.f32 %v1759, %v1851
  %v1853 = vpop.f32.mrb[0].mxu0
  %v1854 = vadd.f32 %v1759, %v1853
  %v1855 = vpop.f32.mrb[0].mxu0
  %v1856 = vpop.f32.mrb[0].mxu0
  %1857 = vdwg.mxu0
  %v1858 = vmax.f32 %v1811, 0.0
  %v1859 = vmax.f32 %v1813, 0.0
  %v1860 = vmax.f32 %v1852, 0.0
  %v1861 = vmax.f32 %v1854, 0.0
  %v1862 = vlaneseq
  %v1863 = vshrl.u32 %v1862, 7
  %v1864 = vsub.s32 0, %v1863
  %v1865 = vrot.slane %v54, %v1864
  %v1866 = vlaneseq
  %v1867 = vshrl.u32 %v1866, 7
  %v1868 = vsub.s32 2, %v1867
  %v1869 = vrot.slane %v54, %v1868
  %v1870 = vlaneseq
  %v1871 = vshrl.u32 %v1870, 7
  %v1872 = vsub.s32 4, %v1871
  %v1873 = vrot.slane %v54, %v1872
  %v1874 = vlaneseq
  %v1875 = vshrl.u32 %v1874, 7
  %v1876 = vsub.s32 6, %v1875
  %v1877 = vrot.slane %v54, %v1876
  %v1882 = vlaneseq
  %v1883 = vshrl.u32 %v1882, 7
  %v1884 = vsub.s32 0, %v1883
  %v1885 = vrot.slane %v1865, %v1884
  %v1886 = vlaneseq
  %v1887 = vshrl.u32 %v1886, 7
  %v1888 = vsub.s32 0, %v1887
  %v1889 = vrot.slane %v1869, %v1888
  %v1890 = vlaneseq
  %v1891 = vshrl.u32 %v1890, 7
  %v1892 = vsub.s32 0, %v1891
  %v1893 = vrot.slane %v1873, %v1892
  %v1894 = vlaneseq
  %v1895 = vshrl.u32 %v1894, 7
  %v1896 = vsub.s32 0, %v1895
  %v1897 = vrot.slane %v1877, %v1896
  %v1898 = vlaneseq
  %v1899 = vshrl.u32 %v1898, 7
  %v1900 = vsub.s32 1, %v1899
  %v1901 = vrot.slane %v54, %v1900
  %v1902 = vlaneseq
  %v1903 = vshrl.u32 %v1902, 7
  %v1904 = vsub.s32 3, %v1903
  %v1905 = vrot.slane %v54, %v1904
  %v1906 = vlaneseq
  %v1907 = vshrl.u32 %v1906, 7
  %v1908 = vsub.s32 5, %v1907
  %v1909 = vrot.slane %v54, %v1908
  %v1910 = vlaneseq
  %v1911 = vshrl.u32 %v1910, 7
  %v1912 = vsub.s32 7, %v1911
  %v1913 = vrot.slane %v54, %v1912
  %v1918 = vlaneseq
  %v1919 = vshrl.u32 %v1918, 7
  %v1920 = vsub.s32 1, %v1919
  %v1921 = vrot.slane %v1901, %v1920
  %v1922 = vlaneseq
  %v1923 = vshrl.u32 %v1922, 7
  %v1924 = vsub.s32 1, %v1923
  %v1925 = vrot.slane %v1905, %v1924
  %v1926 = vlaneseq
  %v1927 = vshrl.u32 %v1926, 7
  %v1928 = vsub.s32 1, %v1927
  %v1929 = vrot.slane %v1909, %v1928
  %v1930 = vlaneseq
  %v1931 = vshrl.u32 %v1930, 7
  %v1932 = vsub.s32 1, %v1931
  %v1933 = vrot.slane %v1913, %v1932
  %v1934 = vsel %vm536, %v1885, %v1921
  %v1935 = vsel %vm536, %v1889, %v1925
  %v1936 = vsel %vm536, %v1893, %v1929
  %v1937 = vsel %vm536, %v1897, %v1933
  %v1938 = vadd.f32 %v1858, %v1934
  %v1939 = vadd.f32 %v1859, %v1935
  %v1940 = vadd.f32 %v1860, %v1936
  %v1941 = vadd.f32 %v1861, %v1937
  %v1942 = vpack.c.bf16 %v1938, %v1938
  %v1943 = vpack.c.bf16 %v1939, %v1939
  %v1944 = vpack.c.bf16 %v1940, %v1940
  %v1945 = vpack.c.bf16 %v1941, %v1941
  %1947 = vrot.lane.b32.xlu0 %v1945, 17
  %v1948 = vpop.permute.xlu0 %1947
  %1952 = vrot.lane.b32.xlu0 %v1942, 17
  %v1953 = vpop.permute.xlu0 %1952
  %1954 = vrot.lane.b32.xlu0 %v1943, 17
  %v1955 = vpop.permute.xlu0 %1954
  %1956 = vrot.lane.b32.xlu0 %v1944, 17
  %v1957 = vpop.permute.xlu0 %1956
  %v1958 = vsel %vm93, %v1953, %v1955
  %v1959 = vsel %vm93, %v1955, %v1957
  %v1960 = vsel %vm93, %v1957, %v1948
  %v1966 = vsel %vm100, %v1948, %v1953
  %v1968 = vmul.bf16 %v1966, %v111
  %v1969 = vmul.bf16 %v1958, %v118
  %v1970 = vmul.bf16 %v1959, %v125
  %v1971 = vmul.bf16 %v1960, %v132
  %1972 = vrot.lane.b32.xlu0 %v1945, 16
  %v1973 = vpop.permute.xlu0 %1972
  %1974 = vrot.lane.b32.xlu0 %v1942, 16
  %v1975 = vpop.permute.xlu0 %1974
  %1976 = vrot.lane.b32.xlu0 %v1943, 16
  %v1977 = vpop.permute.xlu0 %1976
  %1978 = vrot.lane.b32.xlu0 %v1944, 16
  %v1979 = vpop.permute.xlu0 %1978
  %v1980 = vsel %vm145, %v1975, %v1977
  %v1981 = vsel %vm145, %v1977, %v1979
  %v1982 = vsel %vm145, %v1979, %v1973
  %v1988 = vsel %vm152, %v1973, %v1975
  %v1990 = vmul.bf16 %v1988, %v163
  %v1991 = vmul.bf16 %v1980, %v170
  %v1992 = vmul.bf16 %v1981, %v177
  %v1993 = vmul.bf16 %v1982, %v184
  %1994 = vrot.lane.b32.xlu0 %v1945, 15
  %v1995 = vpop.permute.xlu0 %1994
  %1996 = vrot.lane.b32.xlu0 %v1942, 15
  %v1997 = vpop.permute.xlu0 %1996
  %1998 = vrot.lane.b32.xlu0 %v1943, 15
  %v1999 = vpop.permute.xlu0 %1998
  %2000 = vrot.lane.b32.xlu0 %v1944, 15
  %v2001 = vpop.permute.xlu0 %2000
  %v2002 = vsel %vm197, %v1997, %v1999
  %v2003 = vsel %vm197, %v1999, %v2001
  %v2004 = vsel %vm197, %v2001, %v1995
  %v2010 = vsel %vm204, %v1995, %v1997
  %v2012 = vmul.bf16 %v2010, %v212
  %v2013 = vmul.bf16 %v2002, %v216
  %v2014 = vmul.bf16 %v2003, %v220
  %v2015 = vmul.bf16 %v2004, %v224
  %2016 = vrot.lane.b32.xlu0 %v1945, 1
  %v2017 = vpop.permute.xlu0 %2016
  %2018 = vrot.lane.b32.xlu0 %v1942, 1
  %v2019 = vpop.permute.xlu0 %2018
  %2020 = vrot.lane.b32.xlu0 %v1943, 1
  %v2021 = vpop.permute.xlu0 %2020
  %2022 = vrot.lane.b32.xlu0 %v1944, 1
  %v2023 = vpop.permute.xlu0 %2022
  %v2024 = vsel %vm237, %v2019, %v2021
  %v2025 = vsel %vm237, %v2021, %v2023
  %v2026 = vsel %vm237, %v2023, %v2017
  %v2032 = vsel %vm244, %v2017, %v2019
  %v2034 = vmul.bf16 %v2032, %v252
  %v2035 = vmul.bf16 %v2024, %v256
  %v2036 = vmul.bf16 %v2025, %v260
  %v2037 = vmul.bf16 %v2026, %v264
  %v2038 = vmul.bf16 %v1942, %v272
  %v2039 = vmul.bf16 %v1943, %v276
  %v2040 = vmul.bf16 %v1944, %v280
  %v2041 = vmul.bf16 %v1945, %v284
  %2042 = vrot.lane.b32.xlu0 %v1942, 127
  %v2043 = vpop.permute.xlu0 %2042
  %2044 = vrot.lane.b32.xlu0 %v1943, 127
  %v2045 = vpop.permute.xlu0 %2044
  %2046 = vrot.lane.b32.xlu0 %v1944, 127
  %v2047 = vpop.permute.xlu0 %2046
  %2048 = vrot.lane.b32.xlu0 %v1945, 127
  %v2049 = vpop.permute.xlu0 %2048
  %v2050 = vsel %vm297, %v2043, %v2045
  %v2051 = vsel %vm297, %v2045, %v2047
  %v2052 = vsel %vm297, %v2047, %v2049
  %v2058 = vsel %vm304, %v2049, %v2043
  %v2060 = vmul.bf16 %v2050, %v312
  %v2061 = vmul.bf16 %v2051, %v316
  %v2062 = vmul.bf16 %v2052, %v320
  %v2063 = vmul.bf16 %v2058, %v324
  %2064 = vrot.lane.b32.xlu0 %v1942, 113
  %v2065 = vpop.permute.xlu0 %2064
  %2066 = vrot.lane.b32.xlu0 %v1943, 113
  %v2067 = vpop.permute.xlu0 %2066
  %2068 = vrot.lane.b32.xlu0 %v1944, 113
  %v2069 = vpop.permute.xlu0 %2068
  %2070 = vrot.lane.b32.xlu0 %v1945, 113
  %v2071 = vpop.permute.xlu0 %2070
  %v2072 = vsel %vm337, %v2065, %v2067
  %v2073 = vsel %vm337, %v2067, %v2069
  %v2074 = vsel %vm337, %v2069, %v2071
  %v2080 = vsel %vm344, %v2071, %v2065
  %v2082 = vmul.bf16 %v2072, %v352
  %v2083 = vmul.bf16 %v2073, %v356
  %v2084 = vmul.bf16 %v2074, %v360
  %v2085 = vmul.bf16 %v2080, %v364
  %2086 = vrot.lane.b32.xlu0 %v1942, 112
  %v2087 = vpop.permute.xlu0 %2086
  %2088 = vrot.lane.b32.xlu0 %v1943, 112
  %v2089 = vpop.permute.xlu0 %2088
  %2090 = vrot.lane.b32.xlu0 %v1944, 112
  %v2091 = vpop.permute.xlu0 %2090
  %2092 = vrot.lane.b32.xlu0 %v1945, 112
  %v2093 = vpop.permute.xlu0 %2092
  %v2094 = vsel %vm377, %v2087, %v2089
  %v2095 = vsel %vm377, %v2089, %v2091
  %v2096 = vsel %vm377, %v2091, %v2093
  %v2102 = vsel %vm384, %v2093, %v2087
  %v2104 = vmul.bf16 %v2094, %v392
  %v2105 = vmul.bf16 %v2095, %v396
  %v2106 = vmul.bf16 %v2096, %v400
  %v2107 = vmul.bf16 %v2102, %v404
  %2108 = vrot.lane.b32.xlu0 %v1942, 111
  %v2109 = vpop.permute.xlu0 %2108
  %2110 = vrot.lane.b32.xlu0 %v1943, 111
  %v2111 = vpop.permute.xlu0 %2110
  %2112 = vrot.lane.b32.xlu0 %v1944, 111
  %v2113 = vpop.permute.xlu0 %2112
  %2114 = vrot.lane.b32.xlu0 %v1945, 111
  %v2115 = vpop.permute.xlu0 %2114
  %v2116 = vsel %vm417, %v2109, %v2111
  %v2117 = vsel %vm417, %v2111, %v2113
  %v2118 = vsel %vm417, %v2113, %v2115
  %v2124 = vsel %vm424, %v2115, %v2109
  %v2126 = vmul.bf16 %v2116, %v432
  %v2127 = vmul.bf16 %v2117, %v436
  %v2128 = vmul.bf16 %v2118, %v440
  %v2129 = vmul.bf16 %v2124, %v444
  %v2134 = vrot.slane %v1990, 4
  %v2135 = vrot.slane %v1991, 4
  %v2136 = vrot.slane %v1992, 4
  %v2137 = vrot.slane %v1993, 4
  %v2142 = vrot.slane %v2034, 4
  %v2143 = vrot.slane %v2035, 4
  %v2144 = vrot.slane %v2036, 4
  %v2145 = vrot.slane %v2037, 4
  %v2150 = vrot.slane %v2060, 4
  %v2151 = vrot.slane %v2061, 4
  %v2152 = vrot.slane %v2062, 4
  %v2153 = vrot.slane %v2063, 4
  %v2158 = vrot.slane %v2104, 4
  %v2159 = vrot.slane %v2105, 4
  %v2160 = vrot.slane %v2106, 4
  %v2161 = vrot.slane %v2107, 4
  %v2164 = vsel %vm536, %v1968, %v2134
  %v2168 = vsel %vm536, %v1969, %v2135
  %v2172 = vsel %vm536, %v1970, %v2136
  %v2176 = vsel %vm536, %v1971, %v2137
  %v2180 = vsel %vm536, %v2012, %v2142
  %v2184 = vsel %vm536, %v2013, %v2143
  %v2188 = vsel %vm536, %v2014, %v2144
  %v2192 = vsel %vm536, %v2015, %v2145
  %v2196 = vsel %vm536, %v2038, %v2150
  %v2200 = vsel %vm536, %v2039, %v2151
  %v2204 = vsel %vm536, %v2040, %v2152
  %v2208 = vsel %vm536, %v2041, %v2153
  %v2212 = vsel %vm536, %v2082, %v2158
  %v2216 = vsel %vm536, %v2083, %v2159
  %v2220 = vsel %vm536, %v2084, %v2160
  %v2224 = vsel %vm536, %v2085, %v2161
  %v2226 = vld [vmem:[%s10] sm:$0x1]
  %v2227 = vld [vmem:[%s11] sm:$0x3]
  %2229 = vset.pattern.permute.xlu0 0
  %2230 = vperm.xlu0 %2229, %v2227
  %v2231 = vpop.permute.xlu0 %2230
  %v2234 = vsel %vm976, %v2226, 0
  %v2237 = vsel %vm536, %v2126, 0
  %v2240 = vsel %vm536, %v2127, 0
  %v2243 = vsel %vm536, %v2128, 0
  %v2246 = vsel %vm536, %v2129, 0
  %2248 = vmatprep.subr.bf16.mxu0 %v2168
  %2249 = vmatpush1.bf16.msra.mxu0 %v2164
  %2250 = vmatprep.subr.bf16.mxu0 %v2184
  %2251 = vmatpush1.bf16.msra.mxu0 %v2180
  %2252 = vmatprep.subr.bf16.mxu0 %v2200
  %2253 = vmatpush1.bf16.msra.mxu0 %v2196
  %2254 = vmatprep.subr.bf16.mxu0 %v2216
  %2255 = vmatpush1.bf16.msra.mxu0 %v2212
  %2256 = vmatprep.subr.bf16.mxu0 %v2240
  %2257 = vmatpush1.bf16.msra.mxu0 %v2237
  %2258 = vmatprep.subr.bf16.mxu0 0
  %2259 = vmatpush1.bf16.msra.mxu0 0
  %2260 = vmatprep.subr.bf16.mxu0 0
  %2261 = vmatpush1.bf16.msra.mxu0 0
  %2262 = vmatprep.subr.bf16.mxu0 0
  %2263 = vmatpush1.bf16.msra.mxu0 0
  %2264 = vmatprep.subr.bf16.mxu0 0
  %2265 = vmatpush1.bf16.msra.mxu0 0
  %2266 = vmatprep.subr.bf16.mxu0 0
  %2267 = vmatpush1.bf16.msra.mxu0 0
  %2268 = vmatprep.subr.bf16.mxu0 0
  %2269 = vmatpush1.bf16.msra.mxu0 0
  %2270 = vmatprep.subr.bf16.mxu0 0
  %2271 = vmatpush1.bf16.msra.mxu0 0
  %2272 = vmatprep.subr.bf16.mxu0 0
  %2273 = vmatpush1.bf16.msra.mxu0 0
  %2274 = vmatprep.subr.bf16.mxu0 0
  %2275 = vmatpush1.bf16.msra.mxu0 0
  %2276 = vmatprep.subr.bf16.mxu0 0
  %2277 = vmatpush1.bf16.msra.mxu0 0
  %2278 = vmatprep.subr.bf16.mxu0 0
  %2279 = vmatpush1.bf16.msra.mxu0 0
  %2280 = vmatprep.mubr.bf16.mxu0 0
  %2281 = vmatmul.mubr.bf16.gmra.mrb[0].mxu0 %v2234
  %v2282 = vpop.f32.mrb[0].mxu0
  %v2283 = vadd.f32 %v2231, %v2282
  %v2284 = vpop.f32.mrb[0].mxu0
  %v2285 = vadd.f32 %v2231, %v2284
  %v2286 = vpop.f32.mrb[0].mxu0
  %v2287 = vpop.f32.mrb[0].mxu0
  %2288 = vdwg.mxu0
  %2289 = vmatprep.subr.bf16.mxu0 %v2176
  %2290 = vmatpush1.bf16.msra.mxu0 %v2172
  %2291 = vmatprep.subr.bf16.mxu0 %v2192
  %2292 = vmatpush1.bf16.msra.mxu0 %v2188
  %2293 = vmatprep.subr.bf16.mxu0 %v2208
  %2294 = vmatpush1.bf16.msra.mxu0 %v2204
  %2295 = vmatprep.subr.bf16.mxu0 %v2224
  %2296 = vmatpush1.bf16.msra.mxu0 %v2220
  %2297 = vmatprep.subr.bf16.mxu0 %v2246
  %2298 = vmatpush1.bf16.msra.mxu0 %v2243
  %2299 = vmatprep.subr.bf16.mxu0 0
  %2300 = vmatpush1.bf16.msra.mxu0 0
  %2301 = vmatprep.subr.bf16.mxu0 0
  %2302 = vmatpush1.bf16.msra.mxu0 0
  %2303 = vmatprep.subr.bf16.mxu0 0
  %2304 = vmatpush1.bf16.msra.mxu0 0
  %2305 = vmatprep.subr.bf16.mxu0 0
  %2306 = vmatpush1.bf16.msra.mxu0 0
  %2307 = vmatprep.subr.bf16.mxu0 0
  %2308 = vmatpush1.bf16.msra.mxu0 0
  %2309 = vmatprep.subr.bf16.mxu0 0
  %2310 = vmatpush1.bf16.msra.mxu0 0
  %2311 = vmatprep.subr.bf16.mxu0 0
  %2312 = vmatpush1.bf16.msra.mxu0 0
  %2313 = vmatprep.subr.bf16.mxu0 0
  %2314 = vmatpush1.bf16.msra.mxu0 0
  %2315 = vmatprep.subr.bf16.mxu0 0
  %2316 = vmatpush1.bf16.msra.mxu0 0
  %2317 = vmatprep.subr.bf16.mxu0 0
  %2318 = vmatpush1.bf16.msra.mxu0 0
  %2319 = vmatprep.subr.bf16.mxu0 0
  %2320 = vmatpush1.bf16.msra.mxu0 0
  %2321 = vmatprep.mubr.bf16.mxu0 0
  %2322 = vmatmul.mubr.bf16.gmra.mrb[0].mxu0 %v2234
  %v2323 = vpop.f32.mrb[0].mxu0
  %v2324 = vadd.f32 %v2231, %v2323
  %v2325 = vpop.f32.mrb[0].mxu0
  %v2326 = vadd.f32 %v2231, %v2325
  %v2327 = vpop.f32.mrb[0].mxu0
  %v2328 = vpop.f32.mrb[0].mxu0
  %2329 = vdwg.mxu0
  %v2334 = vcombine.low %v2283, %v2285
  %v2335 = vcombine.low %v2324, %v2326
  %v2337 = vunpack.c.l.s4 1983009808
  %v2338 = vunpack.c.0.s8 %v2337
  %v2339 = vlaneseq
  %v2340 = vshrl.u32 %v2339, 7
  %v2341 = vsub.s32 %v2338, %v2340
  %v2342 = vrot.slane %v2334, %v2341
  %v2344 = vunpack.c.l.s4 1983009808
  %v2345 = vunpack.c.0.s8 %v2344
  %v2346 = vlaneseq
  %v2347 = vshrl.u32 %v2346, 7
  %v2348 = vsub.s32 %v2345, %v2347
  %v2349 = vrot.slane %v2335, %v2348
  %v2350 = vcombine.low %v2342, %v2349
  %2352 = vst [vmem:[%s12] sm:$0xff] %v2350
  // Predicated region
  $region50: #{complex_resnet_forward.1} parent=0 // pred_check
    _
  $region51: #{complex_resnet_forward.1} parent=0 // pred_check_branch
    %2354 = sbr.rel (0) target = $region53
  $region52: #{complex_resnet_forward.1} parent=0 // pred_region
    _
  $region53: #{complex_resnet_forward.1} parent=0 // pred_fallthru
    _
  // Predicated region
  $region54: #{complex_resnet_forward.1} parent=0 // pred_check
    _
  $region55: #{complex_resnet_forward.1} parent=0 // pred_check_branch
    %2356 = sbr.rel (0) target = $region57
  $region56: #{complex_resnet_forward.1} parent=0 // pred_region
    _
  $region57: #{complex_resnet_forward.1} parent=0 // pred_fallthru
    _

</llo_original>
